<compile_context>
chip_gen: v6e
topology: v6e:2x2x1
jax: 0.10.0
libtpu: 0.0.40
codegen_flags: <defaults>
</compile_context>

<pallas_src>
import functools

import jax
import jax.numpy as jnp
import numpy as np
from jax import lax
from jax.experimental import pallas as pl
from jax.experimental.pallas import tpu as pltpu


def _round_up(x, m):
    return (x + m - 1) // m * m


def _double_conv_kernel(p1_ref, w1_ref, w2_ref, b2_ref, o_ref, y1_ref, *, TH, W):
    """One (batch, row-tile) grid step of the fused (conv => BN => ReLU) * 2.

    p1_ref : (M1P, K1)        bf16  stage-1 im2col lhs for this tile (flat
                                    extended rows; ring rows are all-zero, the
                                    last K column is the interior gate / bias)
    w1_ref : (K1, Cmid)       bf16  folded conv1+BN1 weights (last row = bias)
    w2_ref : (9, Cmid, COpad) bf16  folded conv2+BN2 weights, one slab per tap
    b2_ref : (1, COpad)       f32   folded conv2+BN2 bias
    o_ref  : (M2E, COpad)     bf16  output slab, M2E = TH*(W+2) (2 garbage
                                    columns per row, sliced off in the wrapper)
    y1_ref : (M1P, Cmid)      bf16  VMEM scratch for the stage-1 activation
    """
    Wp = W + 2
    M2E = TH * Wp

    # ---- stage 1: ONE MXU matmul (K = 9*Cin + 1) + ReLU.
    # conv2's 'same' zero padding is exact because the wrapper zeroed the ring
    # rows of p1 (all-zero lhs row => z1 = 0 => relu = 0); the folded bias only
    # fires where the interior-gate channel is 1.
    z1 = jnp.dot(p1_ref[...], w1_ref[...], preferred_element_type=jnp.float32)
    y1_ref[...] = jnp.maximum(z1, 0.0).astype(jnp.bfloat16)

    # ---- stage 2: nine accumulated K = Cmid matmuls over row-shifted flat
    # views of y1 (flat-shift trick: tap (dy,dx) == row offset dy*Wp + dx).
    acc = jnp.zeros((M2E, o_ref.shape[-1]), jnp.float32)
    for dy in range(3):
        for dx in range(3):
            k = dy * 3 + dx
            lhs = y1_ref[pl.ds(dy * Wp + dx, M2E), :]
            acc = acc + jnp.dot(lhs, w2_ref[k],
                                preferred_element_type=jnp.float32)
    o_ref[...] = jnp.maximum(acc + b2_ref[...], 0.0).astype(o_ref.dtype)


def _fold_conv1_bn(w_oihw, conv_b, gamma, beta, mean, var, eps):
    """Conv1 im2col weights with BN1(eval) folded; bias appended as one K row
    (driven by the wrapper's interior-gate channel).  Shape (9*Cin + 1, Cmid)."""
    cout, cin = w_oihw.shape[0], w_oihw.shape[1]
    scale = gamma / jnp.sqrt(var + eps)                        # (Cmid,)
    # (Cout, Cin, 3, 3) -> (ky, kx, ci, o) -> (9*Cin, Cout); row = (ky*3+kx)*Cin + ci
    w = jnp.transpose(w_oihw, (2, 3, 1, 0)).reshape(9 * cin, cout) * scale[None, :]
    b = (conv_b - mean) * scale + beta
    return jnp.concatenate([w, b[None, :]], axis=0).astype(jnp.bfloat16)


def _fold_conv2_bn_taps(w_oihw, conv_b, gamma, beta, mean, var, eps, copad):
    """Conv2 weights split per tap (9, Cmid, COpad) with BN2(eval) folded and
    the output-channel dim zero-padded to a multiple of 128 (lane-dense stores)."""
    cout, cmid = w_oihw.shape[0], w_oihw.shape[1]
    scale = gamma / jnp.sqrt(var + eps)                        # (Cout,)
    w = jnp.transpose(w_oihw, (2, 3, 1, 0)).reshape(9, cmid, cout) * scale[None, None, :]
    w = jnp.pad(w, ((0, 0), (0, 0), (0, copad - cout))).astype(jnp.bfloat16)
    b = (conv_b - mean) * scale + beta
    b = jnp.pad(b, (0, copad - cout)).reshape(1, copad).astype(jnp.float32)
    return w, b


def _vmem_limit_bytes():
    """Generation-aware VMEM limit: ~40 MiB on v7x (64 MiB physical VMEM/TC),
    ~80 MiB on v5e/v6e (128 MiB physical)."""
    cap = 64 * 1024 * 1024                     # conservative default (v7x)
    try:
        info = pltpu.get_tpu_info()
        cap = int(getattr(info, "vmem_capacity_bytes", cap))
    except Exception:
        pass
    return int(cap * 0.625)


def _tile_vmem_bytes(TH, W, cin, cmid, copad):
    """Per-grid-step VMEM model incl. (8,128) tiling padding, double-buffered
    pipeline blocks and the f32 temporaries Mosaic materialises."""
    Wp = W + 2
    K1 = 9 * cin + 1
    M1P = _round_up((TH + 2) * Wp + 2, 8)
    M2E = TH * Wp
    r8 = lambda v: _round_up(v, 8)
    r128 = lambda v: _round_up(v, 128)
    b = 2 * r8(M1P) * r128(K1) * 2              # p1 slab block (bf16, x2 buffers)
    b += 2 * r8(K1) * r128(cmid) * 2            # w1 (x2 buffers, tiny)
    b += 2 * 9 * r8(cmid) * r128(copad) * 2     # w2 taps (x2 buffers, tiny)
    b += 2 * 8 * r128(copad) * 4                # b2
    b += 2 * r8(M2E) * r128(copad) * 2          # output block (bf16, x2 buffers)
    b += r8(M1P) * r128(cmid) * 2               # y1 VMEM scratch (bf16)
    b += r8(M1P) * r128(cmid) * 4               # z1 f32 temporary
    b += r8(M2E) * r128(copad) * 4              # acc f32 temporary
    b += r8(M2E) * r128(cmid) * 2               # one shifted-lhs relayout copy
    return b


def _pick_tile_rows(H, W, cin, cmid, copad, max_rows, budget):
    """Largest divisor of H <= max_rows whose modelled working set fits."""
    best = 1
    limit = max(1, min(H, max_rows))
    for th in range(1, limit + 1):
        if H % th:
            continue
        if _tile_vmem_bytes(th, W, cin, cmid, copad) <= budget:
            best = th
    return best


def double_conv_forward(x_nchw, p, *, eps=1e-5, max_tile_rows=128):
    """(conv3x3 => BN(eval) => ReLU) * 2 fused in one Pallas call.  NCHW in/out."""
    N, Cin, H, W = x_nchw.shape
    Cmid = p["w1"].shape[0]
    Cout = p["w2"].shape[0]
    COpad = _round_up(Cout, 128)
    Wp = W + 2
    K1 = 9 * Cin + 1

    w1m = _fold_conv1_bn(p["w1"], p["b1"], p["g1"], p["be1"], p["m1"], p["v1"], eps)
    w2t, b2 = _fold_conv2_bn_taps(p["w2"], p["b2"], p["g2"], p["be2"],
                                  p["m2"], p["v2"], eps, COpad)

    # Tile choice: generation-aware VMEM budget + keep >= ~4 grid steps so both
    # v7x TensorCores have parallel work at small batch.
    vmem_limit = _vmem_limit_bytes()
    tiles_needed = max(1, -(-4 // max(N, 1)))          # ceil(4 / N)
    row_cap = max(1, H // tiles_needed)
    TH = _pick_tile_rows(H, W, Cin, Cmid, COpad,
                         min(max_tile_rows, row_cap),
                         budget=int(0.8 * vmem_limit))
    T = H // TH
    M1 = (TH + 2) * Wp
    M1P = _round_up(M1 + 2, 8)                         # flat-shift tail pad
    M2E = TH * Wp

    # ---- wrapper-side stage-1 im2col (one cheap XLA pass over the tiny-Cin
    # input): 9 taps (channel-minor) + a constant interior-gate channel that
    # carries the folded bias, then a zero ring that IS conv2's 'same' padding.
    x = jnp.transpose(x_nchw, (0, 2, 3, 1))                            # NHWC
    xp = jnp.pad(x, ((0, 0), (1, 1), (1, 1), (0, 0)))                  # conv1 pad
    taps = [xp[:, dy:dy + H, dx:dx + W, :] for dy in range(3) for dx in range(3)]
    ones = jnp.ones((N, H, W, 1), x.dtype)
    p1 = jnp.concatenate(taps + [ones], axis=-1)                       # (N,H,W,K1)
    p1 = jnp.pad(p1, ((0, 0), (1, 1), (1, 1), (0, 0))).astype(jnp.bfloat16)

    # Per-row-tile overlapping slabs (flattened rows): every grid step gets a
    # self-contained 2-D matmul lhs through plain blocked BlockSpecs -- no
    # whole-image VMEM residency, no in-kernel im2col.
    slabs = jnp.stack([p1[:, t * TH:t * TH + TH + 2] for t in range(T)], axis=1)
    slabs = slabs.reshape(N, T, M1, K1)
    slabs = jnp.pad(slabs, ((0, 0), (0, 0), (0, M1P - M1), (0, 0)))

    kernel = functools.partial(_double_conv_kernel, TH=TH, W=W)

    out = pl.pallas_call(
        kernel,
        out_shape=jax.ShapeDtypeStruct((N, T, M2E, COpad), jnp.bfloat16),
        grid_spec=pltpu.PrefetchScalarGridSpec(
            num_scalar_prefetch=0,
            grid=(N, T),
            in_specs=[
                pl.BlockSpec((None, None, M1P, K1), lambda b, t: (b, t, 0, 0)),
                pl.BlockSpec((K1, Cmid), lambda b, t: (0, 0)),
                pl.BlockSpec((9, Cmid, COpad), lambda b, t: (0, 0, 0)),
                pl.BlockSpec((1, COpad), lambda b, t: (0, 0)),
            ],
            out_specs=pl.BlockSpec((None, None, M2E, COpad),
                                   lambda b, t: (b, t, 0, 0)),
            scratch_shapes=[pltpu.VMEM((M1P, Cmid), jnp.bfloat16)],
        ),
        compiler_params=pltpu.CompilerParams(
            dimension_semantics=("parallel", "parallel"),
            vmem_limit_bytes=vmem_limit,
        ),
    )(slabs, w1m, w2t, b2)

    # Unpack: drop the 2 garbage columns per row and the Cout padding, back to
    # NCHW f32 to match the PyTorch module.
    out = out.reshape(N, T, TH, Wp, COpad)[:, :, :, :W, :Cout]
    out = out.reshape(N, H, W, Cout)
    # TODO(synk): downstream UNet blocks could consume this NHWC bf16 tensor
    # directly and skip the transpose + f32 cast below (saves an HBM round trip).
    return jnp.transpose(out, (0, 3, 1, 2)).astype(jnp.float32)


def init_double_conv_params(key, in_ch, out_ch):
    """Deterministic synthetic parameters matching double_conv's shapes."""
    ks = jax.random.split(key, 8)
    p = {}
    # conv1: Conv2d(in_ch, out_ch, 3, padding=1)
    p["w1"] = jax.random.normal(ks[0], (out_ch, in_ch, 3, 3), jnp.float32) * 0.1
    p["b1"] = jax.random.normal(ks[1], (out_ch,), jnp.float32) * 0.1
    # bn1: BatchNorm2d(out_ch)  (eval-mode running stats)
    p["g1"] = 1.0 + 0.1 * jax.random.normal(ks[2], (out_ch,), jnp.float32)
    p["be1"] = 0.1 * jax.random.normal(ks[3], (out_ch,), jnp.float32)
    p["m1"] = jnp.zeros((out_ch,), jnp.float32)
    p["v1"] = jnp.ones((out_ch,), jnp.float32)
    # conv2: Conv2d(out_ch, out_ch, 3, padding=1)
    p["w2"] = jax.random.normal(ks[4], (out_ch, out_ch, 3, 3), jnp.float32) * 0.1
    p["b2"] = jax.random.normal(ks[5], (out_ch,), jnp.float32) * 0.1
    # bn2
    p["g2"] = 1.0 + 0.1 * jax.random.normal(ks[6], (out_ch,), jnp.float32)
    p["be2"] = 0.1 * jax.random.normal(ks[7], (out_ch,), jnp.float32)
    p["m2"] = jnp.zeros((out_ch,), jnp.float32)
    p["v2"] = jnp.ones((out_ch,), jnp.float32)
    return p


@functools.partial(jax.jit, static_argnames=("max_tile_rows",))
def inconv_forward(x_nchw, p, max_tile_rows=128):
    """inconv.forward: (conv => BN => ReLU) * 2.  Input/output are NCHW."""
    return double_conv_forward(x_nchw, p, max_tile_rows=max_tile_rows)


def _reference_forward(x_nchw, p, eps=1e-5):
    """Plain-JAX f32 reference (lax.conv) to validate the Pallas kernel."""
    def block(x, w, b, g, be, m, v):
        y = jax.lax.conv_general_dilated(
            x, w, window_strides=(1, 1), padding="SAME",
            dimension_numbers=("NCHW", "OIHW", "NCHW"))
        y = y + b[None, :, None, None]
        y = (y - m[None, :, None, None]) / jnp.sqrt(v[None, :, None, None] + eps)
        y = y * g[None, :, None, None] + be[None, :, None, None]
        return jnp.maximum(y, 0.0)

    x = block(x_nchw, p["w1"], p["b1"], p["g1"], p["be1"], p["m1"], p["v1"])
    x = block(x, p["w2"], p["b2"], p["g2"], p["be2"], p["m2"], p["v2"])
    return x


if __name__ == "__main__":
    key = jax.random.PRNGKey(0)
    k_x, k_p = jax.random.split(key)

    N, in_ch, out_ch, H, W = 2, 4, 8, 16, 16
    x = jax.random.normal(k_x, (N, in_ch, H, W), jnp.float32)
    params = init_double_conv_params(k_p, in_ch, out_ch)

    # max_tile_rows=8 forces >= 2 row tiles at H=16 so the halo/tiling path is exercised.
    out = inconv_forward(x, params, max_tile_rows=8)
    out = jax.block_until_ready(out)

    ref = _reference_forward(x, params)
    assert out.shape == (N, out_ch, H, W), out.shape
    # bf16 MXU operands / bf16 output (f32 accumulation) => relaxed tolerance.
    np.testing.assert_allclose(np.asarray(out), np.asarray(ref),
                               atol=5e-2, rtol=5e-2)
    print("KERNEL_OK")
</pallas_src>

<mosaic_0001>
module attributes {stable_mosaic.version = 11 : i64} {
  func.func @_double_conv_kernel(%arg0: i32, %arg1: i32, %arg2: memref<1x1x184x37xbf16, #tpu.memory_space<vmem>>, %arg3: memref<37x8xbf16, #tpu.memory_space<vmem>>, %arg4: memref<9x8x128xbf16, #tpu.memory_space<vmem>>, %arg5: memref<1x128xf32, #tpu.memory_space<vmem>>, %arg6: memref<1x1x144x128xbf16, #tpu.memory_space<vmem>>, %arg7: memref<184x8xbf16, #tpu.memory_space<vmem>>) attributes {dimension_semantics = [#tpu.dimension_semantics<parallel>, #tpu.dimension_semantics<parallel>], iteration_bounds = array<i64: 2, 2>, scalar_prefetch = 0 : i64, scratch_operands = 1 : i64, tpu.core_type = #tpu.core_type<tc>, window_params = [{transform_indices = @transform_0, window_bounds = array<i64: 1, 1, 184, 37>}, {pipeline_mode = #tpu.pipeline_mode<synchronous>, transform_indices = @transform_1, window_bounds = array<i64: 37, 8>}, {pipeline_mode = #tpu.pipeline_mode<synchronous>, transform_indices = @transform_2, window_bounds = array<i64: 9, 8, 128>}, {pipeline_mode = #tpu.pipeline_mode<synchronous>, transform_indices = @transform_3, window_bounds = array<i64: 1, 128>}, {transform_indices = @transform_4, window_bounds = array<i64: 1, 1, 144, 128>}]} {
    %c0 = arith.constant 0 : index
    %c0_0 = arith.constant 0 : index
    %c0_1 = arith.constant 0 : index
    %c0_2 = arith.constant 0 : index
    %0 = vector.load %arg2[%c0, %c0_0, %c0_1, %c0_2] : memref<1x1x184x37xbf16, #tpu.memory_space<vmem>>, vector<1x1x184x37xbf16>
    %1 = vector.shape_cast %0 : vector<1x1x184x37xbf16> to vector<184x37xbf16>
    %c0_3 = arith.constant 0 : index
    %c0_4 = arith.constant 0 : index
    %2 = vector.load %arg3[%c0_3, %c0_4] : memref<37x8xbf16, #tpu.memory_space<vmem>>, vector<37x8xbf16>
    %cst = arith.constant dense<0.000000e+00> : vector<184x8xf32>
    %3 = tpu.matmul %1, %2, %cst {dimension_numbers = #tpu.dot_dimension_numbers<[1], [0], [0], [1], [0, 0, 1, 1], [], []>} : vector<184x37xbf16>, vector<37x8xbf16>, vector<184x8xf32> -> vector<184x8xf32>
    %cst_5 = arith.constant 0.000000e+00 : f32
    %4 = vector.broadcast %cst_5 : f32 to vector<184x8xf32>
    %5 = arith.maximumf %3, %4 : vector<184x8xf32>
    %6 = arith.truncf %5 : vector<184x8xf32> to vector<184x8xbf16>
    %c0_6 = arith.constant 0 : index
    %c0_7 = arith.constant 0 : index
    %7 = vector.load %arg7[%c0_6, %c0_7] : memref<184x8xbf16, #tpu.memory_space<vmem>>, vector<184x8xbf16>
    tpu.vector_store %arg7[%c0_6, %c0_7], %6 {strides = array<i32>} : memref<184x8xbf16, #tpu.memory_space<vmem>>, vector<184x8xbf16>,
    %cst_8 = arith.constant 0.000000e+00 : f32
    %8 = vector.broadcast %cst_8 : f32 to vector<144x128xf32>
    %c0_9 = arith.constant 0 : index
    %c0_10 = arith.constant 0 : index
    %9 = vector.load %arg7[%c0_9, %c0_10] : memref<184x8xbf16, #tpu.memory_space<vmem>>, vector<144x8xbf16>
    %c0_11 = arith.constant 0 : index
    %c0_12 = arith.constant 0 : index
    %c0_13 = arith.constant 0 : index
    %10 = vector.load %arg4[%c0_11, %c0_12, %c0_13] : memref<9x8x128xbf16, #tpu.memory_space<vmem>>, vector<1x8x128xbf16>
    %11 = vector.shape_cast %10 : vector<1x8x128xbf16> to vector<8x128xbf16>
    %cst_14 = arith.constant dense<0.000000e+00> : vector<144x128xf32>
    %12 = tpu.matmul %9, %11, %cst_14 {dimension_numbers = #tpu.dot_dimension_numbers<[1], [0], [0], [1], [0, 0, 1, 1], [], []>} : vector<144x8xbf16>, vector<8x128xbf16>, vector<144x128xf32> -> vector<144x128xf32>
    %13 = arith.addf %8, %12 : vector<144x128xf32>
    %c1 = arith.constant 1 : index
    %c0_15 = arith.constant 0 : index
    %14 = vector.load %arg7[%c1, %c0_15] : memref<184x8xbf16, #tpu.memory_space<vmem>>, vector<144x8xbf16>
    %c1_16 = arith.constant 1 : index
    %c0_17 = arith.constant 0 : index
    %c0_18 = arith.constant 0 : index
    %15 = vector.load %arg4[%c1_16, %c0_17, %c0_18] : memref<9x8x128xbf16, #tpu.memory_space<vmem>>, vector<1x8x128xbf16>
    %16 = vector.shape_cast %15 : vector<1x8x128xbf16> to vector<8x128xbf16>
    %cst_19 = arith.constant dense<0.000000e+00> : vector<144x128xf32>
    %17 = tpu.matmul %14, %16, %cst_19 {dimension_numbers = #tpu.dot_dimension_numbers<[1], [0], [0], [1], [0, 0, 1, 1], [], []>} : vector<144x8xbf16>, vector<8x128xbf16>, vector<144x128xf32> -> vector<144x128xf32>
    %18 = arith.addf %13, %17 : vector<144x128xf32>
    %c2 = arith.constant 2 : index
    %c0_20 = arith.constant 0 : index
    %19 = vector.load %arg7[%c2, %c0_20] : memref<184x8xbf16, #tpu.memory_space<vmem>>, vector<144x8xbf16>
    %c2_21 = arith.constant 2 : index
    %c0_22 = arith.constant 0 : index
    %c0_23 = arith.constant 0 : index
    %20 = vector.load %arg4[%c2_21, %c0_22, %c0_23] : memref<9x8x128xbf16, #tpu.memory_space<vmem>>, vector<1x8x128xbf16>
    %21 = vector.shape_cast %20 : vector<1x8x128xbf16> to vector<8x128xbf16>
    %cst_24 = arith.constant dense<0.000000e+00> : vector<144x128xf32>
    %22 = tpu.matmul %19, %21, %cst_24 {dimension_numbers = #tpu.dot_dimension_numbers<[1], [0], [0], [1], [0, 0, 1, 1], [], []>} : vector<144x8xbf16>, vector<8x128xbf16>, vector<144x128xf32> -> vector<144x128xf32>
    %23 = arith.addf %18, %22 : vector<144x128xf32>
    %c18 = arith.constant 18 : index
    %c0_25 = arith.constant 0 : index
    %24 = vector.load %arg7[%c18, %c0_25] : memref<184x8xbf16, #tpu.memory_space<vmem>>, vector<144x8xbf16>
    %c3 = arith.constant 3 : index
    %c0_26 = arith.constant 0 : index
    %c0_27 = arith.constant 0 : index
    %25 = vector.load %arg4[%c3, %c0_26, %c0_27] : memref<9x8x128xbf16, #tpu.memory_space<vmem>>, vector<1x8x128xbf16>
    %26 = vector.shape_cast %25 : vector<1x8x128xbf16> to vector<8x128xbf16>
    %cst_28 = arith.constant dense<0.000000e+00> : vector<144x128xf32>
    %27 = tpu.matmul %24, %26, %cst_28 {dimension_numbers = #tpu.dot_dimension_numbers<[1], [0], [0], [1], [0, 0, 1, 1], [], []>} : vector<144x8xbf16>, vector<8x128xbf16>, vector<144x128xf32> -> vector<144x128xf32>
    %28 = arith.addf %23, %27 : vector<144x128xf32>
    %c19 = arith.constant 19 : index
    %c0_29 = arith.constant 0 : index
    %29 = vector.load %arg7[%c19, %c0_29] : memref<184x8xbf16, #tpu.memory_space<vmem>>, vector<144x8xbf16>
    %c4 = arith.constant 4 : index
    %c0_30 = arith.constant 0 : index
    %c0_31 = arith.constant 0 : index
    %30 = vector.load %arg4[%c4, %c0_30, %c0_31] : memref<9x8x128xbf16, #tpu.memory_space<vmem>>, vector<1x8x128xbf16>
    %31 = vector.shape_cast %30 : vector<1x8x128xbf16> to vector<8x128xbf16>
    %cst_32 = arith.constant dense<0.000000e+00> : vector<144x128xf32>
    %32 = tpu.matmul %29, %31, %cst_32 {dimension_numbers = #tpu.dot_dimension_numbers<[1], [0], [0], [1], [0, 0, 1, 1], [], []>} : vector<144x8xbf16>, vector<8x128xbf16>, vector<144x128xf32> -> vector<144x128xf32>
    %33 = arith.addf %28, %32 : vector<144x128xf32>
    %c20 = arith.constant 20 : index
    %c0_33 = arith.constant 0 : index
    %34 = vector.load %arg7[%c20, %c0_33] : memref<184x8xbf16, #tpu.memory_space<vmem>>, vector<144x8xbf16>
    %c5 = arith.constant 5 : index
    %c0_34 = arith.constant 0 : index
    %c0_35 = arith.constant 0 : index
    %35 = vector.load %arg4[%c5, %c0_34, %c0_35] : memref<9x8x128xbf16, #tpu.memory_space<vmem>>, vector<1x8x128xbf16>
    %36 = vector.shape_cast %35 : vector<1x8x128xbf16> to vector<8x128xbf16>
    %cst_36 = arith.constant dense<0.000000e+00> : vector<144x128xf32>
    %37 = tpu.matmul %34, %36, %cst_36 {dimension_numbers = #tpu.dot_dimension_numbers<[1], [0], [0], [1], [0, 0, 1, 1], [], []>} : vector<144x8xbf16>, vector<8x128xbf16>, vector<144x128xf32> -> vector<144x128xf32>
    %38 = arith.addf %33, %37 : vector<144x128xf32>
    %c36 = arith.constant 36 : index
    %c0_37 = arith.constant 0 : index
    %39 = vector.load %arg7[%c36, %c0_37] : memref<184x8xbf16, #tpu.memory_space<vmem>>, vector<144x8xbf16>
    %c6 = arith.constant 6 : index
    %c0_38 = arith.constant 0 : index
    %c0_39 = arith.constant 0 : index
    %40 = vector.load %arg4[%c6, %c0_38, %c0_39] : memref<9x8x128xbf16, #tpu.memory_space<vmem>>, vector<1x8x128xbf16>
    %41 = vector.shape_cast %40 : vector<1x8x128xbf16> to vector<8x128xbf16>
    %cst_40 = arith.constant dense<0.000000e+00> : vector<144x128xf32>
    %42 = tpu.matmul %39, %41, %cst_40 {dimension_numbers = #tpu.dot_dimension_numbers<[1], [0], [0], [1], [0, 0, 1, 1], [], []>} : vector<144x8xbf16>, vector<8x128xbf16>, vector<144x128xf32> -> vector<144x128xf32>
    %43 = arith.addf %38, %42 : vector<144x128xf32>
    %c37 = arith.constant 37 : index
    %c0_41 = arith.constant 0 : index
    %44 = vector.load %arg7[%c37, %c0_41] : memref<184x8xbf16, #tpu.memory_space<vmem>>, vector<144x8xbf16>
    %c7 = arith.constant 7 : index
    %c0_42 = arith.constant 0 : index
    %c0_43 = arith.constant 0 : index
    %45 = vector.load %arg4[%c7, %c0_42, %c0_43] : memref<9x8x128xbf16, #tpu.memory_space<vmem>>, vector<1x8x128xbf16>
    %46 = vector.shape_cast %45 : vector<1x8x128xbf16> to vector<8x128xbf16>
    %cst_44 = arith.constant dense<0.000000e+00> : vector<144x128xf32>
    %47 = tpu.matmul %44, %46, %cst_44 {dimension_numbers = #tpu.dot_dimension_numbers<[1], [0], [0], [1], [0, 0, 1, 1], [], []>} : vector<144x8xbf16>, vector<8x128xbf16>, vector<144x128xf32> -> vector<144x128xf32>
    %48 = arith.addf %43, %47 : vector<144x128xf32>
    %c38 = arith.constant 38 : index
    %c0_45 = arith.constant 0 : index
    %49 = vector.load %arg7[%c38, %c0_45] : memref<184x8xbf16, #tpu.memory_space<vmem>>, vector<144x8xbf16>
    %c8 = arith.constant 8 : index
    %c0_46 = arith.constant 0 : index
    %c0_47 = arith.constant 0 : index
    %50 = vector.load %arg4[%c8, %c0_46, %c0_47] : memref<9x8x128xbf16, #tpu.memory_space<vmem>>, vector<1x8x128xbf16>
    %51 = vector.shape_cast %50 : vector<1x8x128xbf16> to vector<8x128xbf16>
    %cst_48 = arith.constant dense<0.000000e+00> : vector<144x128xf32>
    %52 = tpu.matmul %49, %51, %cst_48 {dimension_numbers = #tpu.dot_dimension_numbers<[1], [0], [0], [1], [0, 0, 1, 1], [], []>} : vector<144x8xbf16>, vector<8x128xbf16>, vector<144x128xf32> -> vector<144x128xf32>
    %53 = arith.addf %48, %52 : vector<144x128xf32>
    %c0_49 = arith.constant 0 : index
    %c0_50 = arith.constant 0 : index
    %54 = vector.load %arg5[%c0_49, %c0_50] : memref<1x128xf32, #tpu.memory_space<vmem>>, vector<1x128xf32>
    %55 = vector.broadcast %54 : vector<1x128xf32> to vector<144x128xf32>
    %56 = arith.addf %53, %55 : vector<144x128xf32>
    %cst_51 = arith.constant 0.000000e+00 : f32
    %57 = vector.broadcast %cst_51 : f32 to vector<144x128xf32>
    %58 = arith.maximumf %56, %57 : vector<144x128xf32>
    %59 = arith.truncf %58 : vector<144x128xf32> to vector<144x128xbf16>
    %c0_52 = arith.constant 0 : index
    %c0_53 = arith.constant 0 : index
    %c0_54 = arith.constant 0 : index
    %c0_55 = arith.constant 0 : index
    %60 = vector.load %arg6[%c0_52, %c0_53, %c0_54, %c0_55] : memref<1x1x144x128xbf16, #tpu.memory_space<vmem>>, vector<1x1x144x128xbf16>
    %61 = vector.shape_cast %60 : vector<1x1x144x128xbf16> to vector<144x128xbf16>
    %62 = vector.shape_cast %59 : vector<144x128xbf16> to vector<1x1x144x128xbf16>
    tpu.vector_store %arg6[%c0_52, %c0_53, %c0_54, %c0_55], %62 {strides = array<i32>} : memref<1x1x144x128xbf16, #tpu.memory_space<vmem>>, vector<1x1x144x128xbf16>,
    return
  }
  func.func @transform_0(%arg0: i32, %arg1: i32) -> (i32, i32, i32, i32) {
    %c0_i32 = arith.constant 0 : i32
    %c0_i32_0 = arith.constant 0 : i32
    %c0_i32_1 = arith.constant 0 : i32
    return %arg0, %arg1, %c0_i32, %c0_i32_0 : i32, i32, i32, i32
  }
  func.func @transform_1(%arg0: i32, %arg1: i32) -> (i32, i32) {
    %c0_i32 = arith.constant 0 : i32
    %c0_i32_0 = arith.constant 0 : i32
    %c0_i32_1 = arith.constant 0 : i32
    return %c0_i32, %c0_i32_0 : i32, i32
  }
  func.func @transform_2(%arg0: i32, %arg1: i32) -> (i32, i32, i32) {
    %c0_i32 = arith.constant 0 : i32
    %c0_i32_0 = arith.constant 0 : i32
    %c0_i32_1 = arith.constant 0 : i32
    %c0_i32_2 = arith.constant 0 : i32
    return %c0_i32, %c0_i32_0, %c0_i32_1 : i32, i32, i32
  }
  func.func @transform_3(%arg0: i32, %arg1: i32) -> (i32, i32) {
    %c0_i32 = arith.constant 0 : i32
    %c0_i32_0 = arith.constant 0 : i32
    %c0_i32_1 = arith.constant 0 : i32
    return %c0_i32, %c0_i32_0 : i32, i32
  }
  func.func @transform_4(%arg0: i32, %arg1: i32) -> (i32, i32, i32, i32) {
    %c0_i32 = arith.constant 0 : i32
    %c0_i32_0 = arith.constant 0 : i32
    %c0_i32_1 = arith.constant 0 : i32
    return %arg0, %arg1, %c0_i32, %c0_i32_0 : i32, i32, i32, i32
  }
}

</mosaic_0001>

<llo_original>
// kernel: inconv_forward.1
$region0: #{inconv_forward.1}
  #allocation0 [shape = 'u32[]', space=smem, size = 0x4, offset = 0x4, fixed_abs, tag = 'smem constant byte address 0x4 - core index']
  #allocation1 [shape = 'u32[144,128]{1,0:T(1,128)}', space=vmem, size = 0x12000, scoped, tag = 'internal scratch']
  #allocation2 [shape = 'bf16[184,8]{1,0:T(8,128)(2,1)}', space=vmem, size = 0xb800, scoped, tag = 'scratch operand']
  %s0 = inlined_call_operand.vmem [shape: bf16[2,2,184,37], index: 0, kind: input, shape index: {}]
  %s1 = inlined_call_operand.vmem [shape: bf16[37,8], index: 1, kind: input, shape index: {}]
  %s2 = inlined_call_operand.vmem [shape: bf16[9,8,128], index: 2, kind: input, shape index: {}]
  %s3 = inlined_call_operand.vmem [shape: f32[1,128], index: 3, kind: input, shape index: {}]
  %s4 = inlined_call_operand.vmem [shape: bf16[2,2,144,128], index: 4, kind: output, shape index: {}]
  %s5 = sld [smem:[#allocation0]]
  $region49: #{inconv_forward.1} parent=0
    _
  %s7 = ssub.s32 1, %s5
  %s8 = scalar_select 0, %s7, %s5
  loop: start=0, step=1, limit=6
  $region2: #{inconv_forward.1} parent=0 // loop_pre_header
    _
  $region3: #{inconv_forward.1} parent=0 // loop_header
    %s10 = sphi 0, %s14
    %p11 = scmp.ge.s32.totalorder %s10, 6
    %s17 = sphi 0, %s29
    %s18 = sphi 0, %s25
    %s19 = sphi 0, %s17
    %s20 = sphi 0, %s18
    %s21 = sphi 0, %s19
    %s22 = sphi 0, %s20
    %s34 = sphi 0, %s36
    %s37 = sphi 0, %s34
    %s38 = sphi 0, %s37
    %s54 = sphi 0, %s38
    %s58 = sphi 0, %s58
    %s60 = sphi 0, %s58
    %s61 = sphi 0, %s60
    %s75 = sphi 0, %s61
    %s79 = sphi 0, %s79
    %s81 = sphi 0, %s79
    %s82 = sphi 0, %s81
    %s96 = sphi 0, %s82
    %s100 = sphi 0, %s100
    %s102 = sphi 0, %s100
    %s103 = sphi 0, %s102
    %s117 = sphi 0, %s103
    %s125 = sphi 0, %s127
    %s128 = sphi 0, %s125
    %s129 = sphi 0, %s128
    %s145 = sphi 0, %s129
  $region4: #{inconv_forward.1} parent=0 // loop_header_branch
    %13 = sbr.rel (%p11) target = $region8
  $region5: #{inconv_forward.1} parent=0 // loop_body
    %s15 = ssub.s32 %s10, 1
    %s16 = ssub.s32 %s10, 2
    %s23 = sadd.s32 1, %s18
    %p24 = scmp.ge.s32.totalorder %s23, 2
    %s25 = scalar_select %p24, 0, %s23
    %s26 = sadd.s32 1, %s17
    %s27 = scalar_select %p24, %s26, %s17
    %p28 = scmp.ge.s32.totalorder %s27, 2
    %s29 = scalar_select %p28, 0, %s27
    %s30 = ssub.s32 %s17, %s29
    %s31 = ssub.s32 %s18, %s25
    %s32 = sor.u32 %s30, %s31
    %p33 = scmp.eq.s32.totalorder %s32, 0
    %s35 = sadd.s32 %s34, 1
    %s36 = scalar_select %p33, %s34, %s35
    %p39 = pneg %p33
    %p40 = scmp.eq.s32.totalorder %s10, 3
    %p41 = por %p39, %p40
    %p42 = scmp.ne.s32.totalorder %s34, %s37
    %p43 = scmp.eq.s32.totalorder %s10, 0
    %p44 = por %p42, %p43
    %p45 = scmp.ne.s32.totalorder %s34, %s37
    %p46 = scmp.eq.s32.totalorder %s15, 3
    %p47 = por %p45, %p46
    %p48 = scmp.ne.s32.totalorder %s37, %s38
    %p49 = scmp.eq.s32.totalorder %s15, 0
    %p50 = por %p48, %p49
    %p51 = scmp.ne.s32.totalorder %s37, %s38
    %p52 = scmp.eq.s32.totalorder %s16, 3
    %p53 = por %p51, %p52
    %p55 = scmp.ne.s32.totalorder %s38, %s54
    %p56 = scmp.eq.s32.totalorder %s16, 0
    %p57 = por %p55, %p56
    %s59 = sadd.s32 %s58, 1
    %p62 = scmp.eq.s32.totalorder %s10, 3
    %p63 = scmp.ne.s32.totalorder %s58, %s60
    %p64 = scmp.eq.s32.totalorder %s10, 0
    %p65 = por %p63, %p64
    %p66 = scmp.ne.s32.totalorder %s58, %s60
    %p67 = scmp.eq.s32.totalorder %s15, 3
    %p68 = por %p66, %p67
    %p69 = scmp.ne.s32.totalorder %s60, %s61
    %p70 = scmp.eq.s32.totalorder %s15, 0
    %p71 = por %p69, %p70
    %p72 = scmp.ne.s32.totalorder %s60, %s61
    %p73 = scmp.eq.s32.totalorder %s16, 3
    %p74 = por %p72, %p73
    %p76 = scmp.ne.s32.totalorder %s61, %s75
    %p77 = scmp.eq.s32.totalorder %s16, 0
    %p78 = por %p76, %p77
    %s80 = sadd.s32 %s79, 1
    %p83 = scmp.eq.s32.totalorder %s10, 3
    %p84 = scmp.ne.s32.totalorder %s79, %s81
    %p85 = scmp.eq.s32.totalorder %s10, 0
    %p86 = por %p84, %p85
    %p87 = scmp.ne.s32.totalorder %s79, %s81
    %p88 = scmp.eq.s32.totalorder %s15, 3
    %p89 = por %p87, %p88
    %p90 = scmp.ne.s32.totalorder %s81, %s82
    %p91 = scmp.eq.s32.totalorder %s15, 0
    %p92 = por %p90, %p91
    %p93 = scmp.ne.s32.totalorder %s81, %s82
    %p94 = scmp.eq.s32.totalorder %s16, 3
    %p95 = por %p93, %p94
    %p97 = scmp.ne.s32.totalorder %s82, %s96
    %p98 = scmp.eq.s32.totalorder %s16, 0
    %p99 = por %p97, %p98
    %s101 = sadd.s32 %s100, 1
    %p104 = scmp.eq.s32.totalorder %s10, 3
    %p105 = scmp.ne.s32.totalorder %s100, %s102
    %p106 = scmp.eq.s32.totalorder %s10, 0
    %p107 = por %p105, %p106
    %p108 = scmp.ne.s32.totalorder %s100, %s102
    %p109 = scmp.eq.s32.totalorder %s15, 3
    %p110 = por %p108, %p109
    %p111 = scmp.ne.s32.totalorder %s102, %s103
    %p112 = scmp.eq.s32.totalorder %s15, 0
    %p113 = por %p111, %p112
    %p114 = scmp.ne.s32.totalorder %s102, %s103
    %p115 = scmp.eq.s32.totalorder %s16, 3
    %p116 = por %p114, %p115
    %p118 = scmp.ne.s32.totalorder %s103, %s117
    %p119 = scmp.eq.s32.totalorder %s16, 0
    %p120 = por %p118, %p119
    %s121 = ssub.s32 %s17, %s29
    %s122 = ssub.s32 %s18, %s25
    %s123 = sor.u32 %s121, %s122
    %p124 = scmp.eq.s32.totalorder %s123, 0
    %s126 = sadd.s32 %s125, 1
    %s127 = scalar_select %p124, %s125, %s126
    %p130 = pneg %p124
    %p131 = scmp.eq.s32.totalorder %s10, 3
    %p132 = por %p130, %p131
    %p133 = scmp.ne.s32.totalorder %s125, %s128
    %p134 = scmp.eq.s32.totalorder %s10, 0
    %p135 = por %p133, %p134
    %p136 = scmp.ne.s32.totalorder %s125, %s128
    %p137 = scmp.eq.s32.totalorder %s15, 3
    %p138 = por %p136, %p137
    %p139 = scmp.ne.s32.totalorder %s128, %s129
    %p140 = scmp.eq.s32.totalorder %s15, 0
    %p141 = por %p139, %p140
    %p142 = scmp.ne.s32.totalorder %s128, %s129
    %p143 = scmp.eq.s32.totalorder %s16, 3
    %p144 = por %p142, %p143
    %p146 = scmp.ne.s32.totalorder %s129, %s145
    %p147 = scmp.eq.s32.totalorder %s16, 0
    %p148 = por %p146, %p147
    %p149 = scmp.le.s32.totalorder 1, %s10
    %p150 = scmp.lt.s32.totalorder %s10, 5
    %p151 = pnand %p149, %p150
    %p152 = pneg %p151
    // Predicated region
    $region9: #{inconv_forward.1} parent=5 // pred_check
      _
    $region10: #{inconv_forward.1} parent=5 // pred_check_branch
      %154 = sbr.rel (%p151) target = $region12
    $region11: #{inconv_forward.1} parent=5 // pred_region
      %s155 = ssub.s32 %s10, 1
      // Predicated region
      $region13: #{inconv_forward.1} parent=11 // pred_check
        %p156 = pneg %p71
      $region14: #{inconv_forward.1} parent=11 // pred_check_branch
        %158 = sbr.rel (%p156) target = $region16
      $region15: #{inconv_forward.1} parent=11 // pred_region
        _
      $region16: #{inconv_forward.1} parent=11 // pred_fallthru
        _
      // Predicated region
      $region17: #{inconv_forward.1} parent=11 // pred_check
        %p159 = pneg %p92
      $region18: #{inconv_forward.1} parent=11 // pred_check_branch
        %161 = sbr.rel (%p159) target = $region20
      $region19: #{inconv_forward.1} parent=11 // pred_region
        _
      $region20: #{inconv_forward.1} parent=11 // pred_fallthru
        _
      // Predicated region
      $region21: #{inconv_forward.1} parent=11 // pred_check
        %p162 = pneg %p113
      $region22: #{inconv_forward.1} parent=11 // pred_check_branch
        %164 = sbr.rel (%p162) target = $region24
      $region23: #{inconv_forward.1} parent=11 // pred_region
        _
      $region24: #{inconv_forward.1} parent=11 // pred_fallthru
        _
    $region12: #{inconv_forward.1} parent=5 // pred_fallthru
      _
    %p165 = scmp.lt.s32.totalorder %s10, 4
    // Predicated region
    $region25: #{inconv_forward.1} parent=5 // pred_check
      %p166 = pneg %p165
    $region26: #{inconv_forward.1} parent=5 // pred_check_branch
      %168 = sbr.rel (%p166) target = $region28
    $region27: #{inconv_forward.1} parent=5 // pred_region
      // Predicated region
      $region29: #{inconv_forward.1} parent=27 // pred_check
        %p169 = pneg %p44
      $region30: #{inconv_forward.1} parent=27 // pred_check_branch
        %171 = sbr.rel (%p169) target = $region32
      $region31: #{inconv_forward.1} parent=27 // pred_region
        %p172 = scmp.lt.s32.totalorder %s17, 1
        %s173 = scalar_select %p172, %s17, 1
        %p174 = scmp.lt.s32.totalorder %s18, 1
        %s175 = scalar_select %p174, %s18, 1
        %s176 = smul.addr %s175, 23
        %s177 = smul.addr %s173, 46
        %s178 = sadd.s32 %s176, %s177
        %s179 = smul.addr %s178, 4
        %s180 = scalar_lea.vmem %s0, %s179
      $region32: #{inconv_forward.1} parent=27 // pred_fallthru
        _
    $region28: #{inconv_forward.1} parent=5 // pred_fallthru
      _
    %p181 = scmp.le.s32.totalorder 1, %s10
    %p182 = scmp.lt.s32.totalorder %s10, 5
    %p183 = pnand %p181, %p182
    %p184 = pneg %p183
    // Predicated region
    $region33: #{inconv_forward.1} parent=5 // pred_check
      _
    $region34: #{inconv_forward.1} parent=5 // pred_check_branch
      %186 = sbr.rel (%p183) target = $region36
    $region35: #{inconv_forward.1} parent=5 // pred_region
      %s187 = ssub.s32 %s10, 1
      %p188 = scmp.lt.s32.totalorder %s19, 1
      %s189 = scalar_select %p188, %s19, 1
      %p190 = scmp.lt.s32.totalorder %s20, 1
      %s191 = scalar_select %p190, %s20, 1
      %s192 = smul.addr %s191, 23
      %s193 = smul.addr %s189, 46
      %s194 = sadd.s32 %s192, %s193
      %s195 = smul.addr %s194, 4
      %s196 = scalar_lea.vmem %s0, %s195
      %p197 = pneg %p50
      %p198 = pneg %p47
      %p199 = pneg %p71
      %p200 = pneg %p68
      %p201 = pneg %p92
      %p202 = pneg %p89
      %p203 = pneg %p113
      %p204 = pneg %p110
      %p205 = pneg %p141
      %p206 = pneg %p138
      %p207 = scmp.lt.s32.totalorder %s19, 1
      %s208 = scalar_select %p207, %s19, 1
      %p209 = scmp.lt.s32.totalorder %s20, 1
      %s210 = scalar_select %p209, %s20, 1
      %s211 = smul.addr %s210, 18
      %s212 = smul.addr %s208, 36
      %s213 = sadd.s32 %s211, %s212
      %s214 = smul.addr %s213, 4
      %s215 = scalar_lea.vmem %s4, %s214
      %p216 = scmp.lt.s32.totalorder %s19, 1
      %s217 = scalar_select %p216, %s19, 1
      %p218 = scmp.lt.s32.totalorder %s20, 1
      %s219 = scalar_select %p218, %s20, 1
      %s220 = smul.addr %s219, 23
      %s221 = smul.addr %s217, 46
      %s222 = sadd.s32 %s220, %s221
      %s223 = smul.addr %s222, 4
      %s224 = scalar_lea.vmem %s0, %s223
      %p225 = scmp.lt.s32.totalorder %s19, 1
      %s226 = scalar_select %p225, %s19, 1
      %p227 = scmp.lt.s32.totalorder %s20, 1
      %s228 = scalar_select %p227, %s20, 1
      %s229 = smul.addr %s228, 18
      %s230 = smul.addr %s226, 36
      %s231 = sadd.s32 %s229, %s230
      %s232 = smul.addr %s231, 4
      %s233 = scalar_lea.vmem %s4, %s232
      %v235 = vld [vmem:[%s224] sm:$0xf]
      %v236 = vld [vmem:[%s224 + $0x4] sm:$0xf]
      %v237 = vld [vmem:[%s224 + $0x8] sm:$0xf]
      %v238 = vld [vmem:[%s224 + $0xc] sm:$0xf]
      %v239 = vld [vmem:[%s224 + $0x10] sm:$0xf]
      %v240 = vld [vmem:[%s224 + $0x14] sm:$0xf]
      %v241 = vld [vmem:[%s224 + $0x18] sm:$0xf]
      %v242 = vld [vmem:[%s224 + $0x1c] sm:$0xf]
      %v243 = vld [vmem:[%s224 + $0x20] sm:$0xf]
      %v244 = vld [vmem:[%s224 + $0x24] sm:$0xf]
      %v245 = vld [vmem:[%s224 + $0x28] sm:$0xf]
      %v246 = vld [vmem:[%s224 + $0x2c] sm:$0xf]
      %v247 = vld [vmem:[%s224 + $0x30] sm:$0xf]
      %v248 = vld [vmem:[%s224 + $0x34] sm:$0xf]
      %v249 = vld [vmem:[%s224 + $0x38] sm:$0xf]
      %v250 = vld [vmem:[%s224 + $0x3c] sm:$0xf]
      %v251 = vld [vmem:[%s224 + $0x40] sm:$0xf]
      %v252 = vld [vmem:[%s224 + $0x44] sm:$0xf]
      %v253 = vld [vmem:[%s224 + $0x48] sm:$0xf]
      %v254 = vld [vmem:[%s224 + $0x4c] sm:$0xf]
      %v255 = vld [vmem:[%s224 + $0x50] sm:$0xf]
      %v256 = vld [vmem:[%s224 + $0x54] sm:$0xf]
      %v257 = vld [vmem:[%s224 + $0x58] sm:$0xf]
      %v258 = vld [vmem:[%s1] sm:$0xf]
      %v259 = vld [vmem:[%s1 + $0x4] sm:$0xf]
      %v260 = vld [vmem:[%s1 + $0x8] sm:$0xf]
      %v261 = vld [vmem:[%s1 + $0xc] sm:$0xf]
      %v262 = vld [vmem:[%s1 + $0x10] sm:$0x7]
      %v286 = vunpack.c.l.b16 %v235
      %v287 = vunpack.c.l.b16 %v236
      %v288 = vunpack.c.l.b16 %v237
      %v289 = vunpack.c.l.b16 %v238
      %v290 = vunpack.c.l.b16 %v239
      %v291 = vunpack.c.l.b16 %v240
      %v292 = vunpack.c.l.b16 %v241
      %v293 = vunpack.c.l.b16 %v242
      %v294 = vunpack.c.l.b16 %v243
      %v295 = vunpack.c.l.b16 %v244
      %v296 = vunpack.c.l.b16 %v245
      %v297 = vunpack.c.l.b16 %v246
      %v298 = vunpack.c.l.b16 %v247
      %v299 = vunpack.c.l.b16 %v248
      %v300 = vunpack.c.l.b16 %v249
      %v301 = vunpack.c.l.b16 %v250
      %v302 = vunpack.c.l.b16 %v251
      %v303 = vunpack.c.l.b16 %v252
      %v304 = vunpack.c.l.b16 %v253
      %v305 = vunpack.c.l.b16 %v254
      %v306 = vunpack.c.l.b16 %v255
      %v307 = vunpack.c.l.b16 %v256
      %v308 = vunpack.c.l.b16 %v257
      %v309 = vpack.c.b16 %v287, %v286
      %v310 = vpack.c.b16 %v289, %v288
      %v311 = vpack.c.b16 %v291, %v290
      %v312 = vpack.c.b16 %v293, %v292
      %v313 = vpack.c.b16 %v295, %v294
      %v314 = vpack.c.b16 %v297, %v296
      %v315 = vpack.c.b16 %v299, %v298
      %v316 = vpack.c.b16 %v301, %v300
      %v317 = vpack.c.b16 %v303, %v302
      %v318 = vpack.c.b16 %v305, %v304
      %v319 = vpack.c.b16 %v307, %v306
      %v320 = vpack.c.b16 %v308, %v308
      %v326 = vunpack.c.l.b16 %v258
      %v327 = vunpack.c.l.b16 %v259
      %v328 = vunpack.c.l.b16 %v260
      %v329 = vunpack.c.l.b16 %v261
      %v330 = vunpack.c.l.b16 %v262
      %v331 = vpack.c.b16 %v327, %v326
      %v332 = vpack.c.b16 %v329, %v328
      %v333 = vpack.c.b16 %v330, %v330
      %vm336 = vcmask 302080
      %v338 = vsel %vm336, %v309, 0
      %v341 = vsel %vm336, %v310, 0
      %v344 = vsel %vm336, %v311, 0
      %v347 = vsel %vm336, %v312, 0
      %v350 = vsel %vm336, %v313, 0
      %v353 = vsel %vm336, %v314, 0
      %v356 = vsel %vm336, %v315, 0
      %v359 = vsel %vm336, %v316, 0
      %v362 = vsel %vm336, %v317, 0
      %v365 = vsel %vm336, %v318, 0
      %v368 = vsel %vm336, %v319, 0
      %v371 = vsel %vm336, %v320, 0
      %vm373 = vcmask 1041408
      %vm374 = vcmask 1042432
      %v375 = vsel %vm373, 4294967295, 65535
      %v376 = vsel %vm374, %v375, 0
      %v378 = vand.u32 %v333, %v376
      %380 = vmatprep.subr.bf16.mxu0 0
      %381 = vmatpush1.bf16.msra.mxu0 0
      %382 = vmatprep.subr.bf16.mxu0 0
      %383 = vmatpush1.bf16.msra.mxu0 0
      %384 = vmatprep.subr.bf16.mxu0 0
      %385 = vmatpush1.bf16.msra.mxu0 0
      %386 = vmatprep.subr.bf16.mxu0 0
      %387 = vmatpush1.bf16.msra.mxu0 0
      %388 = vmatprep.subr.bf16.mxu0 0
      %389 = vmatpush1.bf16.msra.mxu0 0
      %390 = vmatprep.subr.bf16.mxu0 0
      %391 = vmatpush1.bf16.msra.mxu0 %v378
      %392 = vmatprep.subr.bf16.mxu0 0
      %393 = vmatpush1.bf16.msra.mxu0 %v332
      %394 = vmatprep.subr.bf16.mxu0 0
      %395 = vmatpush1.bf16.msra.mxu0 %v331
      %396 = vmatprep.subr.bf16.mxu0 0
      %397 = vmatpush2.bf16.msra.mxu0 0
      %398 = vmatprep.subr.bf16.mxu0 0
      %399 = vmatpush2.bf16.msra.mxu0 0
      %400 = vmatprep.subr.bf16.mxu0 0
      %401 = vmatpush2.bf16.msra.mxu0 0
      %402 = vmatprep.subr.bf16.mxu0 0
      %403 = vmatpush2.bf16.msra.mxu0 0
      %404 = vmatprep.subr.bf16.mxu0 0
      %405 = vmatpush2.bf16.msra.mxu0 0
      %406 = vmatprep.subr.bf16.mxu0 0
      %407 = vmatpush2.bf16.msra.mxu0 0
      %408 = vmatprep.subr.bf16.mxu0 0
      %409 = vmatpush2.bf16.msra.mxu0 0
      %410 = vmatprep.subr.bf16.mxu0 0
      %411 = vmatpush2.bf16.msra.mxu0 0
      %412 = vmatprep.mubr.bf16.mxu0 0
      %413 = vmatmul.mubr.bf16.gmra.mxu0 %v338
      %v414 = vpop.f32.mrf.mxu0
      %v415 = vadd.f32 0.0, %v414
      %v416 = vpop.f32.mrf.mxu0
      %v417 = vpop.f32.mrf.mxu0
      %v418 = vadd.f32 0.0, %v417
      %v419 = vpop.f32.mrf.mxu0
      %420 = vmatprep.mubr.bf16.mxu0 0
      %421 = vmatmul.mubr.bf16.gmra.mxu0 %v341
      %v422 = vpop.f32.mrf.mxu0
      %v423 = vadd.f32 0.0, %v422
      %v424 = vpop.f32.mrf.mxu0
      %v425 = vpop.f32.mrf.mxu0
      %v426 = vadd.f32 0.0, %v425
      %v427 = vpop.f32.mrf.mxu0
      %428 = vmatprep.mubr.bf16.mxu0 0
      %429 = vmatmul.mubr.bf16.gmra.mxu0 %v344
      %v430 = vpop.f32.mrf.mxu0
      %v431 = vadd.f32 0.0, %v430
      %v432 = vpop.f32.mrf.mxu0
      %v433 = vpop.f32.mrf.mxu0
      %v434 = vadd.f32 0.0, %v433
      %v435 = vpop.f32.mrf.mxu0
      %436 = vmatprep.mubr.bf16.mxu0 0
      %437 = vmatmul.mubr.bf16.gmra.mxu0 %v347
      %v438 = vpop.f32.mrf.mxu0
      %v439 = vadd.f32 0.0, %v438
      %v440 = vpop.f32.mrf.mxu0
      %v441 = vpop.f32.mrf.mxu0
      %v442 = vadd.f32 0.0, %v441
      %v443 = vpop.f32.mrf.mxu0
      %444 = vmatprep.mubr.bf16.mxu0 0
      %445 = vmatmul.mubr.bf16.gmra.mxu0 %v350
      %v446 = vpop.f32.mrf.mxu0
      %v447 = vadd.f32 0.0, %v446
      %v448 = vpop.f32.mrf.mxu0
      %v449 = vpop.f32.mrf.mxu0
      %v450 = vadd.f32 0.0, %v449
      %v451 = vpop.f32.mrf.mxu0
      %452 = vmatprep.mubr.bf16.mxu0 0
      %453 = vmatmul.mubr.bf16.gmra.mxu0 %v353
      %v454 = vpop.f32.mrf.mxu0
      %v455 = vadd.f32 0.0, %v454
      %v456 = vpop.f32.mrf.mxu0
      %v457 = vpop.f32.mrf.mxu0
      %v458 = vadd.f32 0.0, %v457
      %v459 = vpop.f32.mrf.mxu0
      %460 = vmatprep.mubr.bf16.mxu0 0
      %461 = vmatmul.mubr.bf16.gmra.mxu0 %v356
      %v462 = vpop.f32.mrf.mxu0
      %v463 = vadd.f32 0.0, %v462
      %v464 = vpop.f32.mrf.mxu0
      %v465 = vpop.f32.mrf.mxu0
      %v466 = vadd.f32 0.0, %v465
      %v467 = vpop.f32.mrf.mxu0
      %468 = vmatprep.mubr.bf16.mxu0 0
      %469 = vmatmul.mubr.bf16.gmra.mxu0 %v359
      %v470 = vpop.f32.mrf.mxu0
      %v471 = vadd.f32 0.0, %v470
      %v472 = vpop.f32.mrf.mxu0
      %v473 = vpop.f32.mrf.mxu0
      %v474 = vadd.f32 0.0, %v473
      %v475 = vpop.f32.mrf.mxu0
      %476 = vmatprep.mubr.bf16.mxu0 0
      %477 = vmatmul.mubr.bf16.gmra.mxu0 %v362
      %v478 = vpop.f32.mrf.mxu0
      %v479 = vadd.f32 0.0, %v478
      %v480 = vpop.f32.mrf.mxu0
      %v481 = vpop.f32.mrf.mxu0
      %v482 = vadd.f32 0.0, %v481
      %v483 = vpop.f32.mrf.mxu0
      %484 = vmatprep.mubr.bf16.mxu0 0
      %485 = vmatmul.mubr.bf16.gmra.mxu0 %v365
      %v486 = vpop.f32.mrf.mxu0
      %v487 = vadd.f32 0.0, %v486
      %v488 = vpop.f32.mrf.mxu0
      %v489 = vpop.f32.mrf.mxu0
      %v490 = vadd.f32 0.0, %v489
      %v491 = vpop.f32.mrf.mxu0
      %492 = vmatprep.mubr.bf16.mxu0 0
      %493 = vmatmul.mubr.bf16.gmra.mxu0 %v368
      %v494 = vpop.f32.mrf.mxu0
      %v495 = vadd.f32 0.0, %v494
      %v496 = vpop.f32.mrf.mxu0
      %v497 = vpop.f32.mrf.mxu0
      %v498 = vadd.f32 0.0, %v497
      %v499 = vpop.f32.mrf.mxu0
      %500 = vmatprep.mubr.bf16.mxu0 0
      %501 = vmatmul.mubr.bf16.gmra.mxu0 %v371
      %v502 = vpop.f32.mrf.mxu0
      %v503 = vadd.f32 0.0, %v502
      %v504 = vpop.f32.mrf.mxu0
      %v505 = vpop.f32.mrf.mxu0
      %v506 = vpop.f32.mrf.mxu0
      %507 = vdwg.mxu0
      %v508 = vmax.f32 %v415, 0.0
      %v509 = vmax.f32 %v418, 0.0
      %v510 = vmax.f32 %v423, 0.0
      %v511 = vmax.f32 %v426, 0.0
      %v512 = vmax.f32 %v431, 0.0
      %v513 = vmax.f32 %v434, 0.0
      %v514 = vmax.f32 %v439, 0.0
      %v515 = vmax.f32 %v442, 0.0
      %v516 = vmax.f32 %v447, 0.0
      %v517 = vmax.f32 %v450, 0.0
      %v518 = vmax.f32 %v455, 0.0
      %v519 = vmax.f32 %v458, 0.0
      %v520 = vmax.f32 %v463, 0.0
      %v521 = vmax.f32 %v466, 0.0
      %v522 = vmax.f32 %v471, 0.0
      %v523 = vmax.f32 %v474, 0.0
      %v524 = vmax.f32 %v479, 0.0
      %v525 = vmax.f32 %v482, 0.0
      %v526 = vmax.f32 %v487, 0.0
      %v527 = vmax.f32 %v490, 0.0
      %v528 = vmax.f32 %v495, 0.0
      %v529 = vmax.f32 %v498, 0.0
      %v530 = vmax.f32 %v503, 0.0
      %v531 = vpack.c.bf16 %v509, %v508
      %v532 = vpack.c.bf16 %v511, %v510
      %v533 = vpack.c.bf16 %v513, %v512
      %v534 = vpack.c.bf16 %v515, %v514
      %v535 = vpack.c.bf16 %v517, %v516
      %v536 = vpack.c.bf16 %v519, %v518
      %v537 = vpack.c.bf16 %v521, %v520
      %v538 = vpack.c.bf16 %v523, %v522
      %v539 = vpack.c.bf16 %v525, %v524
      %v540 = vpack.c.bf16 %v527, %v526
      %v541 = vpack.c.bf16 %v529, %v528
      %v542 = vpack.c.bf16 %v530, %v530
      %v555 = vunpack.c.l.b16 %v531
      %v556 = vunpack.c.h.b16 %v531
      %v557 = vunpack.c.l.b16 %v532
      %v558 = vunpack.c.h.b16 %v532
      %v559 = vunpack.c.l.b16 %v533
      %v560 = vunpack.c.h.b16 %v533
      %v561 = vunpack.c.l.b16 %v534
      %v562 = vunpack.c.h.b16 %v534
      %v563 = vunpack.c.l.b16 %v535
      %v564 = vunpack.c.h.b16 %v535
      %v565 = vunpack.c.l.b16 %v536
      %v566 = vunpack.c.h.b16 %v536
      %v567 = vunpack.c.l.b16 %v537
      %v568 = vunpack.c.h.b16 %v537
      %v569 = vunpack.c.l.b16 %v538
      %v570 = vunpack.c.h.b16 %v538
      %v571 = vunpack.c.l.b16 %v539
      %v572 = vunpack.c.h.b16 %v539
      %v573 = vunpack.c.l.b16 %v540
      %v574 = vunpack.c.h.b16 %v540
      %v575 = vunpack.c.l.b16 %v541
      %v576 = vunpack.c.h.b16 %v541
      %v577 = vunpack.c.l.b16 %v542
      %v578 = vpack.c.b16 %v555, %v555
      %v579 = vpack.c.b16 %v556, %v556
      %v580 = vpack.c.b16 %v557, %v557
      %v581 = vpack.c.b16 %v558, %v558
      %v582 = vpack.c.b16 %v559, %v559
      %v583 = vpack.c.b16 %v560, %v560
      %v584 = vpack.c.b16 %v561, %v561
      %v585 = vpack.c.b16 %v562, %v562
      %v586 = vpack.c.b16 %v563, %v563
      %v587 = vpack.c.b16 %v564, %v564
      %v588 = vpack.c.b16 %v565, %v565
      %v589 = vpack.c.b16 %v566, %v566
      %v590 = vpack.c.b16 %v567, %v567
      %v591 = vpack.c.b16 %v568, %v568
      %v592 = vpack.c.b16 %v569, %v569
      %v593 = vpack.c.b16 %v570, %v570
      %v594 = vpack.c.b16 %v571, %v571
      %v595 = vpack.c.b16 %v572, %v572
      %v596 = vpack.c.b16 %v573, %v573
      %v597 = vpack.c.b16 %v574, %v574
      %v598 = vpack.c.b16 %v575, %v575
      %v599 = vpack.c.b16 %v576, %v576
      %v600 = vpack.c.b16 %v577, %v577
      %vm624 = vcmask 60416
      %625 = vst.msk [vmem:[#allocation2] sm:$0xf] %vm624, %v578
      %626 = vst.msk [vmem:[#allocation2 + $0x4] sm:$0xf] %vm624, %v579
      %627 = vst.msk [vmem:[#allocation2 + $0x8] sm:$0xf] %vm624, %v580
      %628 = vst.msk [vmem:[#allocation2 + $0xc] sm:$0xf] %vm624, %v581
      %629 = vst.msk [vmem:[#allocation2 + $0x10] sm:$0xf] %vm624, %v582
      %630 = vst.msk [vmem:[#allocation2 + $0x14] sm:$0xf] %vm624, %v583
      %631 = vst.msk [vmem:[#allocation2 + $0x18] sm:$0xf] %vm624, %v584
      %632 = vst.msk [vmem:[#allocation2 + $0x1c] sm:$0xf] %vm624, %v585
      %633 = vst.msk [vmem:[#allocation2 + $0x20] sm:$0xf] %vm624, %v586
      %634 = vst.msk [vmem:[#allocation2 + $0x24] sm:$0xf] %vm624, %v587
      %635 = vst.msk [vmem:[#allocation2 + $0x28] sm:$0xf] %vm624, %v588
      %636 = vst.msk [vmem:[#allocation2 + $0x2c] sm:$0xf] %vm624, %v589
      %637 = vst.msk [vmem:[#allocation2 + $0x30] sm:$0xf] %vm624, %v590
      %638 = vst.msk [vmem:[#allocation2 + $0x34] sm:$0xf] %vm624, %v591
      %639 = vst.msk [vmem:[#allocation2 + $0x38] sm:$0xf] %vm624, %v592
      %640 = vst.msk [vmem:[#allocation2 + $0x3c] sm:$0xf] %vm624, %v593
      %641 = vst.msk [vmem:[#allocation2 + $0x40] sm:$0xf] %vm624, %v594
      %642 = vst.msk [vmem:[#allocation2 + $0x44] sm:$0xf] %vm624, %v595
      %643 = vst.msk [vmem:[#allocation2 + $0x48] sm:$0xf] %vm624, %v596
      %644 = vst.msk [vmem:[#allocation2 + $0x4c] sm:$0xf] %vm624, %v597
      %645 = vst.msk [vmem:[#allocation2 + $0x50] sm:$0xf] %vm624, %v598
      %646 = vst.msk [vmem:[#allocation2 + $0x54] sm:$0xf] %vm624, %v599
      %647 = vst.msk [vmem:[#allocation2 + $0x58] sm:$0xf] %vm624, %v600
      %v648 = vld [vmem:[#allocation2] sm:$0xf]
      %v649 = vld [vmem:[#allocation2 + $0x4] sm:$0xf]
      %v650 = vld [vmem:[#allocation2 + $0x8] sm:$0xf]
      %v651 = vld [vmem:[#allocation2 + $0xc] sm:$0xf]
      %v652 = vld [vmem:[#allocation2 + $0x10] sm:$0xf]
      %v653 = vld [vmem:[#allocation2 + $0x14] sm:$0xf]
      %v654 = vld [vmem:[#allocation2 + $0x18] sm:$0xf]
      %v655 = vld [vmem:[#allocation2 + $0x1c] sm:$0xf]
      %v656 = vld [vmem:[#allocation2 + $0x20] sm:$0xf]
      %v657 = vld [vmem:[#allocation2 + $0x24] sm:$0xf]
      %v658 = vld [vmem:[#allocation2 + $0x28] sm:$0xf]
      %v659 = vld [vmem:[#allocation2 + $0x2c] sm:$0xf]
      %v660 = vld [vmem:[#allocation2 + $0x30] sm:$0xf]
      %v661 = vld [vmem:[#allocation2 + $0x34] sm:$0xf]
      %v662 = vld [vmem:[#allocation2 + $0x38] sm:$0xf]
      %v663 = vld [vmem:[#allocation2 + $0x3c] sm:$0xf]
      %v664 = vld [vmem:[#allocation2 + $0x40] sm:$0xf]
      %v665 = vld [vmem:[#allocation2 + $0x44] sm:$0xf]
      %v666 = vld [vmem:[%s2] sm:$0xf]
      %v667 = vld [vmem:[#allocation2 + $0x48] sm:$0x1]
      %s668 = scalar_lea.vmem %s2, 4
      %v669 = vld [vmem:[%s668] sm:$0xf]
      %v689 = vunpack.c.l.b16 %v648
      %v690 = vunpack.c.l.b16 %v649
      %v691 = vunpack.c.l.b16 %v650
      %v692 = vunpack.c.l.b16 %v651
      %v693 = vunpack.c.l.b16 %v652
      %v694 = vunpack.c.l.b16 %v653
      %v695 = vunpack.c.l.b16 %v654
      %v696 = vunpack.c.l.b16 %v655
      %v697 = vunpack.c.l.b16 %v656
      %v698 = vunpack.c.l.b16 %v657
      %v699 = vunpack.c.l.b16 %v658
      %v700 = vunpack.c.l.b16 %v659
      %v701 = vunpack.c.l.b16 %v660
      %v702 = vunpack.c.l.b16 %v661
      %v703 = vunpack.c.l.b16 %v662
      %v704 = vunpack.c.l.b16 %v663
      %v705 = vunpack.c.l.b16 %v664
      %v706 = vunpack.c.l.b16 %v665
      %v707 = vunpack.c.l.b16 %v667
      %v708 = vpack.c.b16 %v690, %v689
      %v709 = vpack.c.b16 %v692, %v691
      %v710 = vpack.c.b16 %v694, %v693
      %v711 = vpack.c.b16 %v696, %v695
      %v712 = vpack.c.b16 %v698, %v697
      %v713 = vpack.c.b16 %v700, %v699
      %v714 = vpack.c.b16 %v702, %v701
      %v715 = vpack.c.b16 %v704, %v703
      %v716 = vpack.c.b16 %v706, %v705
      %v717 = vpack.c.b16 %v707, %v707
      %vm718 = vsmask.f32 7424
      %v720 = vshrl.u32 %v708, 16
      %v722 = vshll.u32 %v708, 16
      %v724 = vrot.slane %v722, 1
      %v725 = vor.u32 %v720, %v724
      %v727 = vshll.u32 %v709, 16
      %v729 = vrot.slane %v727, 1
      %v730 = vsel %vm718, %v725, %v729
      %v731 = vshrl.u32 %v709, 16
      %v733 = vor.u32 %v731, %v729
      %v735 = vshll.u32 %v710, 16
      %v737 = vrot.slane %v735, 1
      %v738 = vsel %vm718, %v733, %v737
      %v739 = vshrl.u32 %v710, 16
      %v741 = vor.u32 %v739, %v737
      %v743 = vshll.u32 %v711, 16
      %v745 = vrot.slane %v743, 1
      %v746 = vsel %vm718, %v741, %v745
      %v747 = vshrl.u32 %v711, 16
      %v749 = vor.u32 %v747, %v745
      %v751 = vshll.u32 %v712, 16
      %v753 = vrot.slane %v751, 1
      %v754 = vsel %vm718, %v749, %v753
      %v755 = vshrl.u32 %v712, 16
      %v757 = vor.u32 %v755, %v753
      %v759 = vshll.u32 %v713, 16
      %v761 = vrot.slane %v759, 1
      %v762 = vsel %vm718, %v757, %v761
      %v763 = vshrl.u32 %v713, 16
      %v765 = vor.u32 %v763, %v761
      %v767 = vshll.u32 %v714, 16
      %v769 = vrot.slane %v767, 1
      %v770 = vsel %vm718, %v765, %v769
      %v771 = vshrl.u32 %v714, 16
      %v773 = vor.u32 %v771, %v769
      %v775 = vshll.u32 %v715, 16
      %v777 = vrot.slane %v775, 1
      %v778 = vsel %vm718, %v773, %v777
      %v779 = vshrl.u32 %v715, 16
      %v781 = vor.u32 %v779, %v777
      %v783 = vshll.u32 %v716, 16
      %v785 = vrot.slane %v783, 1
      %v786 = vsel %vm718, %v781, %v785
      %v787 = vshrl.u32 %v716, 16
      %v789 = vor.u32 %v787, %v785
      %v791 = vshll.u32 %v717, 16
      %v793 = vrot.slane %v791, 1
      %v794 = vsel %vm718, %v789, %v793
      %vm795 = vcmask 64512
      %v797 = vsel %vm795, %v730, 0
      %v800 = vsel %vm795, %v738, 0
      %v803 = vsel %vm795, %v746, 0
      %v806 = vsel %vm795, %v754, 0
      %v809 = vsel %vm795, %v762, 0
      %v812 = vsel %vm795, %v770, 0
      %v815 = vsel %vm795, %v778, 0
      %v818 = vsel %vm795, %v786, 0
      %v821 = vsel %vm795, %v794, 0
      %vm823 = vcmask 1043456
      %v825 = vsel %vm823, %v669, 0
      %827 = vmatprep.subr.bf16.mxu0 0
      %828 = vmatpush1.bf16.msra.mxu0 0
      %829 = vmatprep.subr.bf16.mxu0 0
      %830 = vmatpush1.bf16.msra.mxu0 0
      %831 = vmatprep.subr.bf16.mxu0 0
      %832 = vmatpush1.bf16.msra.mxu0 0
      %833 = vmatprep.subr.bf16.mxu0 0
      %834 = vmatpush1.bf16.msra.mxu0 0
      %835 = vmatprep.subr.bf16.mxu0 0
      %836 = vmatpush1.bf16.msra.mxu0 0
      %837 = vmatprep.subr.bf16.mxu0 0
      %838 = vmatpush1.bf16.msra.mxu0 0
      %839 = vmatprep.subr.bf16.mxu0 0
      %840 = vmatpush1.bf16.msra.mxu0 0
      %841 = vmatprep.subr.bf16.mxu0 0
      %842 = vmatpush1.bf16.msra.mxu0 %v825
      %843 = vmatprep.subr.bf16.mxu0 0
      %844 = vmatpush2.bf16.msra.mxu0 0
      %845 = vmatprep.subr.bf16.mxu0 0
      %846 = vmatpush2.bf16.msra.mxu0 0
      %847 = vmatprep.subr.bf16.mxu0 0
      %848 = vmatpush2.bf16.msra.mxu0 0
      %849 = vmatprep.subr.bf16.mxu0 0
      %850 = vmatpush2.bf16.msra.mxu0 0
      %851 = vmatprep.subr.bf16.mxu0 0
      %852 = vmatpush2.bf16.msra.mxu0 0
      %853 = vmatprep.subr.bf16.mxu0 0
      %854 = vmatpush2.bf16.msra.mxu0 0
      %855 = vmatprep.subr.bf16.mxu0 0
      %856 = vmatpush2.bf16.msra.mxu0 0
      %857 = vmatprep.subr.bf16.mxu0 0
      %858 = vmatpush2.bf16.msra.mxu0 0
      %859 = vmatprep.mubr.bf16.mxu0 0
      %860 = vmatmul.mubr.bf16.gmra.mxu0 %v797
      %v861 = vpop.f32.mrf.mxu0
      %v862 = vadd.f32 0.0, %v861
      %v863 = vpop.f32.mrf.mxu0
      %v864 = vpop.f32.mrf.mxu0
      %v865 = vadd.f32 0.0, %v864
      %v866 = vpop.f32.mrf.mxu0
      %867 = vmatprep.mubr.bf16.mxu0 0
      %868 = vmatmul.mubr.bf16.gmra.mxu0 %v800
      %v869 = vpop.f32.mrf.mxu0
      %v870 = vadd.f32 0.0, %v869
      %v871 = vpop.f32.mrf.mxu0
      %v872 = vpop.f32.mrf.mxu0
      %v873 = vadd.f32 0.0, %v872
      %v874 = vpop.f32.mrf.mxu0
      %875 = vmatprep.mubr.bf16.mxu0 0
      %876 = vmatmul.mubr.bf16.gmra.mxu0 %v803
      %v877 = vpop.f32.mrf.mxu0
      %v878 = vadd.f32 0.0, %v877
      %v879 = vpop.f32.mrf.mxu0
      %v880 = vpop.f32.mrf.mxu0
      %v881 = vadd.f32 0.0, %v880
      %v882 = vpop.f32.mrf.mxu0
      %883 = vmatprep.mubr.bf16.mxu0 0
      %884 = vmatmul.mubr.bf16.gmra.mxu0 %v806
      %v885 = vpop.f32.mrf.mxu0
      %v886 = vadd.f32 0.0, %v885
      %v887 = vpop.f32.mrf.mxu0
      %v888 = vpop.f32.mrf.mxu0
      %v889 = vadd.f32 0.0, %v888
      %v890 = vpop.f32.mrf.mxu0
      %891 = vmatprep.mubr.bf16.mxu0 0
      %892 = vmatmul.mubr.bf16.gmra.mxu0 %v809
      %v893 = vpop.f32.mrf.mxu0
      %v894 = vadd.f32 0.0, %v893
      %v895 = vpop.f32.mrf.mxu0
      %v896 = vpop.f32.mrf.mxu0
      %v897 = vadd.f32 0.0, %v896
      %v898 = vpop.f32.mrf.mxu0
      %899 = vmatprep.mubr.bf16.mxu0 0
      %900 = vmatmul.mubr.bf16.gmra.mxu0 %v812
      %v901 = vpop.f32.mrf.mxu0
      %v902 = vadd.f32 0.0, %v901
      %v903 = vpop.f32.mrf.mxu0
      %v904 = vpop.f32.mrf.mxu0
      %v905 = vadd.f32 0.0, %v904
      %v906 = vpop.f32.mrf.mxu0
      %907 = vmatprep.mubr.bf16.mxu0 0
      %908 = vmatmul.mubr.bf16.gmra.mxu0 %v815
      %v909 = vpop.f32.mrf.mxu0
      %v910 = vadd.f32 0.0, %v909
      %v911 = vpop.f32.mrf.mxu0
      %v912 = vpop.f32.mrf.mxu0
      %v913 = vadd.f32 0.0, %v912
      %v914 = vpop.f32.mrf.mxu0
      %915 = vmatprep.mubr.bf16.mxu0 0
      %916 = vmatmul.mubr.bf16.gmra.mxu0 %v818
      %v917 = vpop.f32.mrf.mxu0
      %v918 = vadd.f32 0.0, %v917
      %v919 = vpop.f32.mrf.mxu0
      %v920 = vpop.f32.mrf.mxu0
      %v921 = vadd.f32 0.0, %v920
      %v922 = vpop.f32.mrf.mxu0
      %923 = vmatprep.mubr.bf16.mxu0 0
      %924 = vmatmul.mubr.bf16.gmra.mxu0 %v821
      %v925 = vpop.f32.mrf.mxu0
      %v926 = vadd.f32 0.0, %v925
      %v927 = vpop.f32.mrf.mxu0
      %v928 = vpop.f32.mrf.mxu0
      %v929 = vadd.f32 0.0, %v928
      %v930 = vpop.f32.mrf.mxu0
      %931 = vdwg.mxu0
      %v932 = vsel %vm795, %v708, 0
      %v934 = vsel %vm795, %v709, 0
      %v936 = vsel %vm795, %v710, 0
      %v938 = vsel %vm795, %v711, 0
      %v940 = vsel %vm795, %v712, 0
      %v942 = vsel %vm795, %v713, 0
      %v944 = vsel %vm795, %v714, 0
      %v946 = vsel %vm795, %v715, 0
      %v948 = vsel %vm795, %v716, 0
      %v951 = vsel %vm823, %v666, 0
      %953 = vmatprep.subr.bf16.mxu0 0
      %954 = vmatpush1.bf16.msra.mxu0 0
      %955 = vmatprep.subr.bf16.mxu0 0
      %956 = vmatpush1.bf16.msra.mxu0 0
      %957 = vmatprep.subr.bf16.mxu0 0
      %958 = vmatpush1.bf16.msra.mxu0 0
      %959 = vmatprep.subr.bf16.mxu0 0
      %960 = vmatpush1.bf16.msra.mxu0 0
      %961 = vmatprep.subr.bf16.mxu0 0
      %962 = vmatpush1.bf16.msra.mxu0 0
      %963 = vmatprep.subr.bf16.mxu0 0
      %964 = vmatpush1.bf16.msra.mxu0 0
      %965 = vmatprep.subr.bf16.mxu0 0
      %966 = vmatpush1.bf16.msra.mxu0 0
      %967 = vmatprep.subr.bf16.mxu0 0
      %968 = vmatpush1.bf16.msra.mxu0 %v951
      %969 = vmatprep.subr.bf16.mxu0 0
      %970 = vmatpush2.bf16.msra.mxu0 0
      %971 = vmatprep.subr.bf16.mxu0 0
      %972 = vmatpush2.bf16.msra.mxu0 0
      %973 = vmatprep.subr.bf16.mxu0 0
      %974 = vmatpush2.bf16.msra.mxu0 0
      %975 = vmatprep.subr.bf16.mxu0 0
      %976 = vmatpush2.bf16.msra.mxu0 0
      %977 = vmatprep.subr.bf16.mxu0 0
      %978 = vmatpush2.bf16.msra.mxu0 0
      %979 = vmatprep.subr.bf16.mxu0 0
      %980 = vmatpush2.bf16.msra.mxu0 0
      %981 = vmatprep.subr.bf16.mxu0 0
      %982 = vmatpush2.bf16.msra.mxu0 0
      %983 = vmatprep.subr.bf16.mxu0 0
      %984 = vmatpush2.bf16.msra.mxu0 0
      %985 = vmatprep.mubr.bf16.mxu0 0
      %986 = vmatmul.mubr.bf16.gmra.mxu0 %v932
      %v987 = vpop.f32.mrf.mxu0
      %v988 = vadd.f32 %v862, %v987
      %v989 = vpop.f32.mrf.mxu0
      %v990 = vpop.f32.mrf.mxu0
      %v991 = vadd.f32 %v865, %v990
      %v992 = vpop.f32.mrf.mxu0
      %993 = vmatprep.mubr.bf16.mxu0 0
      %994 = vmatmul.mubr.bf16.gmra.mxu0 %v934
      %v995 = vpop.f32.mrf.mxu0
      %v996 = vadd.f32 %v870, %v995
      %v997 = vpop.f32.mrf.mxu0
      %v998 = vpop.f32.mrf.mxu0
      %v999 = vadd.f32 %v873, %v998
      %v1000 = vpop.f32.mrf.mxu0
      %1001 = vmatprep.mubr.bf16.mxu0 0
      %1002 = vmatmul.mubr.bf16.gmra.mxu0 %v936
      %v1003 = vpop.f32.mrf.mxu0
      %v1004 = vadd.f32 %v878, %v1003
      %v1005 = vpop.f32.mrf.mxu0
      %v1006 = vpop.f32.mrf.mxu0
      %v1007 = vadd.f32 %v881, %v1006
      %v1008 = vpop.f32.mrf.mxu0
      %1009 = vmatprep.mubr.bf16.mxu0 0
      %1010 = vmatmul.mubr.bf16.gmra.mxu0 %v938
      %v1011 = vpop.f32.mrf.mxu0
      %v1012 = vadd.f32 %v886, %v1011
      %v1013 = vpop.f32.mrf.mxu0
      %v1014 = vpop.f32.mrf.mxu0
      %v1015 = vadd.f32 %v889, %v1014
      %v1016 = vpop.f32.mrf.mxu0
      %1017 = vmatprep.mubr.bf16.mxu0 0
      %1018 = vmatmul.mubr.bf16.gmra.mxu0 %v940
      %v1019 = vpop.f32.mrf.mxu0
      %v1020 = vadd.f32 %v894, %v1019
      %v1021 = vpop.f32.mrf.mxu0
      %v1022 = vpop.f32.mrf.mxu0
      %v1023 = vadd.f32 %v897, %v1022
      %v1024 = vpop.f32.mrf.mxu0
      %1025 = vmatprep.mubr.bf16.mxu0 0
      %1026 = vmatmul.mubr.bf16.gmra.mxu0 %v942
      %v1027 = vpop.f32.mrf.mxu0
      %v1028 = vadd.f32 %v902, %v1027
      %v1029 = vpop.f32.mrf.mxu0
      %v1030 = vpop.f32.mrf.mxu0
      %v1031 = vadd.f32 %v905, %v1030
      %v1032 = vpop.f32.mrf.mxu0
      %1033 = vmatprep.mubr.bf16.mxu0 0
      %1034 = vmatmul.mubr.bf16.gmra.mxu0 %v944
      %v1035 = vpop.f32.mrf.mxu0
      %v1036 = vadd.f32 %v910, %v1035
      %v1037 = vpop.f32.mrf.mxu0
      %v1038 = vpop.f32.mrf.mxu0
      %v1039 = vadd.f32 %v913, %v1038
      %v1040 = vpop.f32.mrf.mxu0
      %1041 = vmatprep.mubr.bf16.mxu0 0
      %1042 = vmatmul.mubr.bf16.gmra.mxu0 %v946
      %v1043 = vpop.f32.mrf.mxu0
      %v1044 = vadd.f32 %v918, %v1043
      %v1045 = vpop.f32.mrf.mxu0
      %v1046 = vpop.f32.mrf.mxu0
      %v1047 = vadd.f32 %v921, %v1046
      %v1048 = vpop.f32.mrf.mxu0
      %1049 = vmatprep.mubr.bf16.mxu0 0
      %1050 = vmatmul.mubr.bf16.gmra.mxu0 %v948
      %v1051 = vpop.f32.mrf.mxu0
      %v1052 = vadd.f32 %v926, %v1051
      %v1053 = vpop.f32.mrf.mxu0
      %v1054 = vpop.f32.mrf.mxu0
      %v1055 = vadd.f32 %v929, %v1054
      %v1056 = vpop.f32.mrf.mxu0
      %1057 = vdwg.mxu0
      %v1058 = vld [vmem:[#allocation2] sm:$0xe]
      %s1059 = scalar_lea.vmem %s2, 8
      %v1060 = vld [vmem:[%s1059] sm:$0xf]
      %v1062 = vunpack.c.l.b16 %v1058
      %v1063 = vpack.c.b16 %v690, %v1062
      %vm1064 = vcmask 1046528
      %v1065 = vrot.slane %v1063, 1
      %v1066 = vrot.slane %v709, 1
      %v1067 = vsel %vm1064, %v1065, %v1066
      %v1068 = vrot.slane %v710, 1
      %v1069 = vsel %vm1064, %v1066, %v1068
      %v1070 = vrot.slane %v711, 1
      %v1071 = vsel %vm1064, %v1068, %v1070
      %v1072 = vrot.slane %v712, 1
      %v1073 = vsel %vm1064, %v1070, %v1072
      %v1074 = vrot.slane %v713, 1
      %v1075 = vsel %vm1064, %v1072, %v1074
      %v1076 = vrot.slane %v714, 1
      %v1077 = vsel %vm1064, %v1074, %v1076
      %v1078 = vrot.slane %v715, 1
      %v1079 = vsel %vm1064, %v1076, %v1078
      %v1080 = vrot.slane %v716, 1
      %v1081 = vsel %vm1064, %v1078, %v1080
      %v1082 = vrot.slane %v717, 1
      %v1083 = vsel %vm1064, %v1080, %v1082
      %v1085 = vsel %vm795, %v1067, 0
      %v1088 = vsel %vm795, %v1069, 0
      %v1091 = vsel %vm795, %v1071, 0
      %v1094 = vsel %vm795, %v1073, 0
      %v1097 = vsel %vm795, %v1075, 0
      %v1100 = vsel %vm795, %v1077, 0
      %v1103 = vsel %vm795, %v1079, 0
      %v1106 = vsel %vm795, %v1081, 0
      %v1109 = vsel %vm795, %v1083, 0
      %v1112 = vsel %vm823, %v1060, 0
      %1114 = vmatprep.subr.bf16.mxu0 0
      %1115 = vmatpush1.bf16.msra.mxu0 0
      %1116 = vmatprep.subr.bf16.mxu0 0
      %1117 = vmatpush1.bf16.msra.mxu0 0
      %1118 = vmatprep.subr.bf16.mxu0 0
      %1119 = vmatpush1.bf16.msra.mxu0 0
      %1120 = vmatprep.subr.bf16.mxu0 0
      %1121 = vmatpush1.bf16.msra.mxu0 0
      %1122 = vmatprep.subr.bf16.mxu0 0
      %1123 = vmatpush1.bf16.msra.mxu0 0
      %1124 = vmatprep.subr.bf16.mxu0 0
      %1125 = vmatpush1.bf16.msra.mxu0 0
      %1126 = vmatprep.subr.bf16.mxu0 0
      %1127 = vmatpush1.bf16.msra.mxu0 0
      %1128 = vmatprep.subr.bf16.mxu0 0
      %1129 = vmatpush1.bf16.msra.mxu0 %v1112
      %1130 = vmatprep.subr.bf16.mxu0 0
      %1131 = vmatpush2.bf16.msra.mxu0 0
      %1132 = vmatprep.subr.bf16.mxu0 0
      %1133 = vmatpush2.bf16.msra.mxu0 0
      %1134 = vmatprep.subr.bf16.mxu0 0
      %1135 = vmatpush2.bf16.msra.mxu0 0
      %1136 = vmatprep.subr.bf16.mxu0 0
      %1137 = vmatpush2.bf16.msra.mxu0 0
      %1138 = vmatprep.subr.bf16.mxu0 0
      %1139 = vmatpush2.bf16.msra.mxu0 0
      %1140 = vmatprep.subr.bf16.mxu0 0
      %1141 = vmatpush2.bf16.msra.mxu0 0
      %1142 = vmatprep.subr.bf16.mxu0 0
      %1143 = vmatpush2.bf16.msra.mxu0 0
      %1144 = vmatprep.subr.bf16.mxu0 0
      %1145 = vmatpush2.bf16.msra.mxu0 0
      %1146 = vmatprep.mubr.bf16.mxu0 0
      %1147 = vmatmul.mubr.bf16.gmra.mxu0 %v1085
      %v1148 = vpop.f32.mrf.mxu0
      %v1149 = vadd.f32 0.0, %v1148
      %v1150 = vpop.f32.mrf.mxu0
      %v1151 = vpop.f32.mrf.mxu0
      %v1152 = vadd.f32 0.0, %v1151
      %v1153 = vpop.f32.mrf.mxu0
      %1154 = vmatprep.mubr.bf16.mxu0 0
      %1155 = vmatmul.mubr.bf16.gmra.mxu0 %v1088
      %v1156 = vpop.f32.mrf.mxu0
      %v1157 = vadd.f32 0.0, %v1156
      %v1158 = vpop.f32.mrf.mxu0
      %v1159 = vpop.f32.mrf.mxu0
      %v1160 = vadd.f32 0.0, %v1159
      %v1161 = vpop.f32.mrf.mxu0
      %1162 = vmatprep.mubr.bf16.mxu0 0
      %1163 = vmatmul.mubr.bf16.gmra.mxu0 %v1091
      %v1164 = vpop.f32.mrf.mxu0
      %v1165 = vadd.f32 0.0, %v1164
      %v1166 = vpop.f32.mrf.mxu0
      %v1167 = vpop.f32.mrf.mxu0
      %v1168 = vadd.f32 0.0, %v1167
      %v1169 = vpop.f32.mrf.mxu0
      %1170 = vmatprep.mubr.bf16.mxu0 0
      %1171 = vmatmul.mubr.bf16.gmra.mxu0 %v1094
      %v1172 = vpop.f32.mrf.mxu0
      %v1173 = vadd.f32 0.0, %v1172
      %v1174 = vpop.f32.mrf.mxu0
      %v1175 = vpop.f32.mrf.mxu0
      %v1176 = vadd.f32 0.0, %v1175
      %v1177 = vpop.f32.mrf.mxu0
      %1178 = vmatprep.mubr.bf16.mxu0 0
      %1179 = vmatmul.mubr.bf16.gmra.mxu0 %v1097
      %v1180 = vpop.f32.mrf.mxu0
      %v1181 = vadd.f32 0.0, %v1180
      %v1182 = vpop.f32.mrf.mxu0
      %v1183 = vpop.f32.mrf.mxu0
      %v1184 = vadd.f32 0.0, %v1183
      %v1185 = vpop.f32.mrf.mxu0
      %1186 = vmatprep.mubr.bf16.mxu0 0
      %1187 = vmatmul.mubr.bf16.gmra.mxu0 %v1100
      %v1188 = vpop.f32.mrf.mxu0
      %v1189 = vadd.f32 0.0, %v1188
      %v1190 = vpop.f32.mrf.mxu0
      %v1191 = vpop.f32.mrf.mxu0
      %v1192 = vadd.f32 0.0, %v1191
      %v1193 = vpop.f32.mrf.mxu0
      %1194 = vmatprep.mubr.bf16.mxu0 0
      %1195 = vmatmul.mubr.bf16.gmra.mxu0 %v1103
      %v1196 = vpop.f32.mrf.mxu0
      %v1197 = vadd.f32 0.0, %v1196
      %v1198 = vpop.f32.mrf.mxu0
      %v1199 = vpop.f32.mrf.mxu0
      %v1200 = vadd.f32 0.0, %v1199
      %v1201 = vpop.f32.mrf.mxu0
      %1202 = vmatprep.mubr.bf16.mxu0 0
      %1203 = vmatmul.mubr.bf16.gmra.mxu0 %v1106
      %v1204 = vpop.f32.mrf.mxu0
      %v1205 = vadd.f32 0.0, %v1204
      %v1206 = vpop.f32.mrf.mxu0
      %v1207 = vpop.f32.mrf.mxu0
      %v1208 = vadd.f32 0.0, %v1207
      %v1209 = vpop.f32.mrf.mxu0
      %1210 = vmatprep.mubr.bf16.mxu0 0
      %1211 = vmatmul.mubr.bf16.gmra.mxu0 %v1109
      %v1212 = vpop.f32.mrf.mxu0
      %v1213 = vadd.f32 0.0, %v1212
      %v1214 = vpop.f32.mrf.mxu0
      %v1215 = vpop.f32.mrf.mxu0
      %v1216 = vadd.f32 0.0, %v1215
      %v1217 = vpop.f32.mrf.mxu0
      %1218 = vdwg.mxu0
      %v1219 = vadd.f32 %v988, %v1149
      %v1220 = vadd.f32 %v991, %v1152
      %v1221 = vadd.f32 %v996, %v1157
      %v1222 = vadd.f32 %v999, %v1160
      %v1223 = vadd.f32 %v1004, %v1165
      %v1224 = vadd.f32 %v1007, %v1168
      %v1225 = vadd.f32 %v1012, %v1173
      %v1226 = vadd.f32 %v1015, %v1176
      %v1227 = vadd.f32 %v1020, %v1181
      %v1228 = vadd.f32 %v1023, %v1184
      %v1229 = vadd.f32 %v1028, %v1189
      %v1230 = vadd.f32 %v1031, %v1192
      %v1231 = vadd.f32 %v1036, %v1197
      %v1232 = vadd.f32 %v1039, %v1200
      %v1233 = vadd.f32 %v1044, %v1205
      %v1234 = vadd.f32 %v1047, %v1208
      %v1235 = vadd.f32 %v1052, %v1213
      %v1236 = vadd.f32 %v1055, %v1216
      %v1237 = vld [vmem:[#allocation2 + $0x8] sm:$0xe]
      %v1238 = vld [vmem:[#allocation2 + $0xc] sm:$0xf]
      %v1239 = vld [vmem:[#allocation2 + $0x10] sm:$0xf]
      %v1240 = vld [vmem:[#allocation2 + $0x14] sm:$0xf]
      %v1241 = vld [vmem:[#allocation2 + $0x18] sm:$0xf]
      %v1242 = vld [vmem:[#allocation2 + $0x1c] sm:$0xf]
      %v1243 = vld [vmem:[#allocation2 + $0x20] sm:$0xf]
      %v1244 = vld [vmem:[#allocation2 + $0x24] sm:$0xf]
      %v1245 = vld [vmem:[#allocation2 + $0x28] sm:$0xf]
      %v1246 = vld [vmem:[#allocation2 + $0x2c] sm:$0xf]
      %v1247 = vld [vmem:[#allocation2 + $0x30] sm:$0xf]
      %v1248 = vld [vmem:[#allocation2 + $0x34] sm:$0xf]
      %v1249 = vld [vmem:[#allocation2 + $0x38] sm:$0xf]
      %v1250 = vld [vmem:[#allocation2 + $0x3c] sm:$0xf]
      %v1251 = vld [vmem:[#allocation2 + $0x40] sm:$0xf]
      %v1252 = vld [vmem:[#allocation2 + $0x44] sm:$0xf]
      %v1253 = vld [vmem:[#allocation2 + $0x48] sm:$0xf]
      %v1254 = vld [vmem:[#allocation2 + $0x4c] sm:$0xf]
      %v1255 = vld [vmem:[#allocation2 + $0x50] sm:$0x1]
      %s1256 = scalar_lea.vmem %s2, 12
      %v1257 = vld [vmem:[%s1256] sm:$0xf]
      %v1277 = vunpack.c.l.b16 %v1237
      %v1278 = vunpack.c.l.b16 %v1238
      %v1279 = vunpack.c.l.b16 %v1239
      %v1280 = vunpack.c.l.b16 %v1240
      %v1281 = vunpack.c.l.b16 %v1241
      %v1282 = vunpack.c.l.b16 %v1242
      %v1283 = vunpack.c.l.b16 %v1243
      %v1284 = vunpack.c.l.b16 %v1244
      %v1285 = vunpack.c.l.b16 %v1245
      %v1286 = vunpack.c.l.b16 %v1246
      %v1287 = vunpack.c.l.b16 %v1247
      %v1288 = vunpack.c.l.b16 %v1248
      %v1289 = vunpack.c.l.b16 %v1249
      %v1290 = vunpack.c.l.b16 %v1250
      %v1291 = vunpack.c.l.b16 %v1251
      %v1292 = vunpack.c.l.b16 %v1252
      %v1293 = vunpack.c.l.b16 %v1253
      %v1294 = vunpack.c.l.b16 %v1254
      %v1295 = vunpack.c.l.b16 %v1255
      %v1296 = vpack.c.b16 %v1278, %v1277
      %v1297 = vpack.c.b16 %v1280, %v1279
      %v1298 = vpack.c.b16 %v1282, %v1281
      %v1299 = vpack.c.b16 %v1284, %v1283
      %v1300 = vpack.c.b16 %v1286, %v1285
      %v1301 = vpack.c.b16 %v1288, %v1287
      %v1302 = vpack.c.b16 %v1290, %v1289
      %v1303 = vpack.c.b16 %v1292, %v1291
      %v1304 = vpack.c.b16 %v1294, %v1293
      %v1305 = vpack.c.b16 %v1295, %v1295
      %v1306 = vrot.slane %v1296, 1
      %v1307 = vrot.slane %v1297, 1
      %v1308 = vsel %vm1064, %v1306, %v1307
      %v1309 = vrot.slane %v1298, 1
      %v1310 = vsel %vm1064, %v1307, %v1309
      %v1311 = vrot.slane %v1299, 1
      %v1312 = vsel %vm1064, %v1309, %v1311
      %v1313 = vrot.slane %v1300, 1
      %v1314 = vsel %vm1064, %v1311, %v1313
      %v1315 = vrot.slane %v1301, 1
      %v1316 = vsel %vm1064, %v1313, %v1315
      %v1317 = vrot.slane %v1302, 1
      %v1318 = vsel %vm1064, %v1315, %v1317
      %v1319 = vrot.slane %v1303, 1
      %v1320 = vsel %vm1064, %v1317, %v1319
      %v1321 = vrot.slane %v1304, 1
      %v1322 = vsel %vm1064, %v1319, %v1321
      %v1323 = vrot.slane %v1305, 1
      %v1324 = vsel %vm1064, %v1321, %v1323
      %v1326 = vsel %vm795, %v1308, 0
      %v1329 = vsel %vm795, %v1310, 0
      %v1332 = vsel %vm795, %v1312, 0
      %v1335 = vsel %vm795, %v1314, 0
      %v1338 = vsel %vm795, %v1316, 0
      %v1341 = vsel %vm795, %v1318, 0
      %v1344 = vsel %vm795, %v1320, 0
      %v1347 = vsel %vm795, %v1322, 0
      %v1350 = vsel %vm795, %v1324, 0
      %v1353 = vsel %vm823, %v1257, 0
      %1355 = vmatprep.subr.bf16.mxu0 0
      %1356 = vmatpush1.bf16.msra.mxu0 0
      %1357 = vmatprep.subr.bf16.mxu0 0
      %1358 = vmatpush1.bf16.msra.mxu0 0
      %1359 = vmatprep.subr.bf16.mxu0 0
      %1360 = vmatpush1.bf16.msra.mxu0 0
      %1361 = vmatprep.subr.bf16.mxu0 0
      %1362 = vmatpush1.bf16.msra.mxu0 0
      %1363 = vmatprep.subr.bf16.mxu0 0
      %1364 = vmatpush1.bf16.msra.mxu0 0
      %1365 = vmatprep.subr.bf16.mxu0 0
      %1366 = vmatpush1.bf16.msra.mxu0 0
      %1367 = vmatprep.subr.bf16.mxu0 0
      %1368 = vmatpush1.bf16.msra.mxu0 0
      %1369 = vmatprep.subr.bf16.mxu0 0
      %1370 = vmatpush1.bf16.msra.mxu0 %v1353
      %1371 = vmatprep.subr.bf16.mxu0 0
      %1372 = vmatpush2.bf16.msra.mxu0 0
      %1373 = vmatprep.subr.bf16.mxu0 0
      %1374 = vmatpush2.bf16.msra.mxu0 0
      %1375 = vmatprep.subr.bf16.mxu0 0
      %1376 = vmatpush2.bf16.msra.mxu0 0
      %1377 = vmatprep.subr.bf16.mxu0 0
      %1378 = vmatpush2.bf16.msra.mxu0 0
      %1379 = vmatprep.subr.bf16.mxu0 0
      %1380 = vmatpush2.bf16.msra.mxu0 0
      %1381 = vmatprep.subr.bf16.mxu0 0
      %1382 = vmatpush2.bf16.msra.mxu0 0
      %1383 = vmatprep.subr.bf16.mxu0 0
      %1384 = vmatpush2.bf16.msra.mxu0 0
      %1385 = vmatprep.subr.bf16.mxu0 0
      %1386 = vmatpush2.bf16.msra.mxu0 0
      %1387 = vmatprep.mubr.bf16.mxu0 0
      %1388 = vmatmul.mubr.bf16.gmra.mxu0 %v1326
      %v1389 = vpop.f32.mrf.mxu0
      %v1390 = vadd.f32 0.0, %v1389
      %v1391 = vpop.f32.mrf.mxu0
      %v1392 = vpop.f32.mrf.mxu0
      %v1393 = vadd.f32 0.0, %v1392
      %v1394 = vpop.f32.mrf.mxu0
      %1395 = vmatprep.mubr.bf16.mxu0 0
      %1396 = vmatmul.mubr.bf16.gmra.mxu0 %v1329
      %v1397 = vpop.f32.mrf.mxu0
      %v1398 = vadd.f32 0.0, %v1397
      %v1399 = vpop.f32.mrf.mxu0
      %v1400 = vpop.f32.mrf.mxu0
      %v1401 = vadd.f32 0.0, %v1400
      %v1402 = vpop.f32.mrf.mxu0
      %1403 = vmatprep.mubr.bf16.mxu0 0
      %1404 = vmatmul.mubr.bf16.gmra.mxu0 %v1332
      %v1405 = vpop.f32.mrf.mxu0
      %v1406 = vadd.f32 0.0, %v1405
      %v1407 = vpop.f32.mrf.mxu0
      %v1408 = vpop.f32.mrf.mxu0
      %v1409 = vadd.f32 0.0, %v1408
      %v1410 = vpop.f32.mrf.mxu0
      %1411 = vmatprep.mubr.bf16.mxu0 0
      %1412 = vmatmul.mubr.bf16.gmra.mxu0 %v1335
      %v1413 = vpop.f32.mrf.mxu0
      %v1414 = vadd.f32 0.0, %v1413
      %v1415 = vpop.f32.mrf.mxu0
      %v1416 = vpop.f32.mrf.mxu0
      %v1417 = vadd.f32 0.0, %v1416
      %v1418 = vpop.f32.mrf.mxu0
      %1419 = vmatprep.mubr.bf16.mxu0 0
      %1420 = vmatmul.mubr.bf16.gmra.mxu0 %v1338
      %v1421 = vpop.f32.mrf.mxu0
      %v1422 = vadd.f32 0.0, %v1421
      %v1423 = vpop.f32.mrf.mxu0
      %v1424 = vpop.f32.mrf.mxu0
      %v1425 = vadd.f32 0.0, %v1424
      %v1426 = vpop.f32.mrf.mxu0
      %1427 = vmatprep.mubr.bf16.mxu0 0
      %1428 = vmatmul.mubr.bf16.gmra.mxu0 %v1341
      %v1429 = vpop.f32.mrf.mxu0
      %v1430 = vadd.f32 0.0, %v1429
      %v1431 = vpop.f32.mrf.mxu0
      %v1432 = vpop.f32.mrf.mxu0
      %v1433 = vadd.f32 0.0, %v1432
      %v1434 = vpop.f32.mrf.mxu0
      %1435 = vmatprep.mubr.bf16.mxu0 0
      %1436 = vmatmul.mubr.bf16.gmra.mxu0 %v1344
      %v1437 = vpop.f32.mrf.mxu0
      %v1438 = vadd.f32 0.0, %v1437
      %v1439 = vpop.f32.mrf.mxu0
      %v1440 = vpop.f32.mrf.mxu0
      %v1441 = vadd.f32 0.0, %v1440
      %v1442 = vpop.f32.mrf.mxu0
      %1443 = vmatprep.mubr.bf16.mxu0 0
      %1444 = vmatmul.mubr.bf16.gmra.mxu0 %v1347
      %v1445 = vpop.f32.mrf.mxu0
      %v1446 = vadd.f32 0.0, %v1445
      %v1447 = vpop.f32.mrf.mxu0
      %v1448 = vpop.f32.mrf.mxu0
      %v1449 = vadd.f32 0.0, %v1448
      %v1450 = vpop.f32.mrf.mxu0
      %1451 = vmatprep.mubr.bf16.mxu0 0
      %1452 = vmatmul.mubr.bf16.gmra.mxu0 %v1350
      %v1453 = vpop.f32.mrf.mxu0
      %v1454 = vadd.f32 0.0, %v1453
      %v1455 = vpop.f32.mrf.mxu0
      %v1456 = vpop.f32.mrf.mxu0
      %v1457 = vadd.f32 0.0, %v1456
      %v1458 = vpop.f32.mrf.mxu0
      %1459 = vdwg.mxu0
      %v1460 = vadd.f32 %v1219, %v1390
      %v1461 = vadd.f32 %v1220, %v1393
      %v1462 = vadd.f32 %v1221, %v1398
      %v1463 = vadd.f32 %v1222, %v1401
      %v1464 = vadd.f32 %v1223, %v1406
      %v1465 = vadd.f32 %v1224, %v1409
      %v1466 = vadd.f32 %v1225, %v1414
      %v1467 = vadd.f32 %v1226, %v1417
      %v1468 = vadd.f32 %v1227, %v1422
      %v1469 = vadd.f32 %v1228, %v1425
      %v1470 = vadd.f32 %v1229, %v1430
      %v1471 = vadd.f32 %v1230, %v1433
      %v1472 = vadd.f32 %v1231, %v1438
      %v1473 = vadd.f32 %v1232, %v1441
      %v1474 = vadd.f32 %v1233, %v1446
      %v1475 = vadd.f32 %v1234, %v1449
      %v1476 = vadd.f32 %v1235, %v1454
      %v1477 = vadd.f32 %v1236, %v1457
      %v1478 = vld [vmem:[#allocation2 + $0x50] sm:$0x3]
      %s1479 = scalar_lea.vmem %s2, 16
      %v1480 = vld [vmem:[%s1479] sm:$0xf]
      %v1482 = vunpack.c.l.b16 %v1478
      %v1483 = vpack.c.b16 %v1482, %v1482
      %vm1484 = vsmask.f32 6400
      %v1486 = vshrl.u32 %v1296, 16
      %v1488 = vrot.slane %v1486, 1
      %v1489 = vshll.u32 %v1296, 16
      %v1491 = vrot.slane %v1489, 2
      %v1492 = vor.u32 %v1488, %v1491
      %v1494 = vshrl.u32 %v1297, 16
      %v1496 = vrot.slane %v1494, 1
      %v1497 = vshll.u32 %v1297, 16
      %v1499 = vrot.slane %v1497, 2
      %v1500 = vor.u32 %v1496, %v1499
      %v1501 = vsel %vm1484, %v1492, %v1500
      %v1503 = vshrl.u32 %v1298, 16
      %v1505 = vrot.slane %v1503, 1
      %v1506 = vshll.u32 %v1298, 16
      %v1508 = vrot.slane %v1506, 2
      %v1509 = vor.u32 %v1505, %v1508
      %v1510 = vsel %vm1484, %v1500, %v1509
      %v1512 = vshrl.u32 %v1299, 16
      %v1514 = vrot.slane %v1512, 1
      %v1515 = vshll.u32 %v1299, 16
      %v1517 = vrot.slane %v1515, 2
      %v1518 = vor.u32 %v1514, %v1517
      %v1519 = vsel %vm1484, %v1509, %v1518
      %v1521 = vshrl.u32 %v1300, 16
      %v1523 = vrot.slane %v1521, 1
      %v1524 = vshll.u32 %v1300, 16
      %v1526 = vrot.slane %v1524, 2
      %v1527 = vor.u32 %v1523, %v1526
      %v1528 = vsel %vm1484, %v1518, %v1527
      %v1530 = vshrl.u32 %v1301, 16
      %v1532 = vrot.slane %v1530, 1
      %v1533 = vshll.u32 %v1301, 16
      %v1535 = vrot.slane %v1533, 2
      %v1536 = vor.u32 %v1532, %v1535
      %v1537 = vsel %vm1484, %v1527, %v1536
      %v1539 = vshrl.u32 %v1302, 16
      %v1541 = vrot.slane %v1539, 1
      %v1542 = vshll.u32 %v1302, 16
      %v1544 = vrot.slane %v1542, 2
      %v1545 = vor.u32 %v1541, %v1544
      %v1546 = vsel %vm1484, %v1536, %v1545
      %v1548 = vshrl.u32 %v1303, 16
      %v1550 = vrot.slane %v1548, 1
      %v1551 = vshll.u32 %v1303, 16
      %v1553 = vrot.slane %v1551, 2
      %v1554 = vor.u32 %v1550, %v1553
      %v1555 = vsel %vm1484, %v1545, %v1554
      %v1557 = vshrl.u32 %v1304, 16
      %v1559 = vrot.slane %v1557, 1
      %v1560 = vshll.u32 %v1304, 16
      %v1562 = vrot.slane %v1560, 2
      %v1563 = vor.u32 %v1559, %v1562
      %v1564 = vsel %vm1484, %v1554, %v1563
      %v1566 = vshrl.u32 %v1483, 16
      %v1568 = vrot.slane %v1566, 1
      %v1569 = vshll.u32 %v1483, 16
      %v1571 = vrot.slane %v1569, 2
      %v1572 = vor.u32 %v1568, %v1571
      %v1573 = vsel %vm1484, %v1563, %v1572
      %v1575 = vsel %vm795, %v1501, 0
      %v1578 = vsel %vm795, %v1510, 0
      %v1581 = vsel %vm795, %v1519, 0
      %v1584 = vsel %vm795, %v1528, 0
      %v1587 = vsel %vm795, %v1537, 0
      %v1590 = vsel %vm795, %v1546, 0
      %v1593 = vsel %vm795, %v1555, 0
      %v1596 = vsel %vm795, %v1564, 0
      %v1599 = vsel %vm795, %v1573, 0
      %v1602 = vsel %vm823, %v1480, 0
      %1604 = vmatprep.subr.bf16.mxu0 0
      %1605 = vmatpush1.bf16.msra.mxu0 0
      %1606 = vmatprep.subr.bf16.mxu0 0
      %1607 = vmatpush1.bf16.msra.mxu0 0
      %1608 = vmatprep.subr.bf16.mxu0 0
      %1609 = vmatpush1.bf16.msra.mxu0 0
      %1610 = vmatprep.subr.bf16.mxu0 0
      %1611 = vmatpush1.bf16.msra.mxu0 0
      %1612 = vmatprep.subr.bf16.mxu0 0
      %1613 = vmatpush1.bf16.msra.mxu0 0
      %1614 = vmatprep.subr.bf16.mxu0 0
      %1615 = vmatpush1.bf16.msra.mxu0 0
      %1616 = vmatprep.subr.bf16.mxu0 0
      %1617 = vmatpush1.bf16.msra.mxu0 0
      %1618 = vmatprep.subr.bf16.mxu0 0
      %1619 = vmatpush1.bf16.msra.mxu0 %v1602
      %1620 = vmatprep.subr.bf16.mxu0 0
      %1621 = vmatpush2.bf16.msra.mxu0 0
      %1622 = vmatprep.subr.bf16.mxu0 0
      %1623 = vmatpush2.bf16.msra.mxu0 0
      %1624 = vmatprep.subr.bf16.mxu0 0
      %1625 = vmatpush2.bf16.msra.mxu0 0
      %1626 = vmatprep.subr.bf16.mxu0 0
      %1627 = vmatpush2.bf16.msra.mxu0 0
      %1628 = vmatprep.subr.bf16.mxu0 0
      %1629 = vmatpush2.bf16.msra.mxu0 0
      %1630 = vmatprep.subr.bf16.mxu0 0
      %1631 = vmatpush2.bf16.msra.mxu0 0
      %1632 = vmatprep.subr.bf16.mxu0 0
      %1633 = vmatpush2.bf16.msra.mxu0 0
      %1634 = vmatprep.subr.bf16.mxu0 0
      %1635 = vmatpush2.bf16.msra.mxu0 0
      %1636 = vmatprep.mubr.bf16.mxu0 0
      %1637 = vmatmul.mubr.bf16.gmra.mxu0 %v1575
      %v1638 = vpop.f32.mrf.mxu0
      %v1639 = vadd.f32 0.0, %v1638
      %v1640 = vpop.f32.mrf.mxu0
      %v1641 = vpop.f32.mrf.mxu0
      %v1642 = vadd.f32 0.0, %v1641
      %v1643 = vpop.f32.mrf.mxu0
      %1644 = vmatprep.mubr.bf16.mxu0 0
      %1645 = vmatmul.mubr.bf16.gmra.mxu0 %v1578
      %v1646 = vpop.f32.mrf.mxu0
      %v1647 = vadd.f32 0.0, %v1646
      %v1648 = vpop.f32.mrf.mxu0
      %v1649 = vpop.f32.mrf.mxu0
      %v1650 = vadd.f32 0.0, %v1649
      %v1651 = vpop.f32.mrf.mxu0
      %1652 = vmatprep.mubr.bf16.mxu0 0
      %1653 = vmatmul.mubr.bf16.gmra.mxu0 %v1581
      %v1654 = vpop.f32.mrf.mxu0
      %v1655 = vadd.f32 0.0, %v1654
      %v1656 = vpop.f32.mrf.mxu0
      %v1657 = vpop.f32.mrf.mxu0
      %v1658 = vadd.f32 0.0, %v1657
      %v1659 = vpop.f32.mrf.mxu0
      %1660 = vmatprep.mubr.bf16.mxu0 0
      %1661 = vmatmul.mubr.bf16.gmra.mxu0 %v1584
      %v1662 = vpop.f32.mrf.mxu0
      %v1663 = vadd.f32 0.0, %v1662
      %v1664 = vpop.f32.mrf.mxu0
      %v1665 = vpop.f32.mrf.mxu0
      %v1666 = vadd.f32 0.0, %v1665
      %v1667 = vpop.f32.mrf.mxu0
      %1668 = vmatprep.mubr.bf16.mxu0 0
      %1669 = vmatmul.mubr.bf16.gmra.mxu0 %v1587
      %v1670 = vpop.f32.mrf.mxu0
      %v1671 = vadd.f32 0.0, %v1670
      %v1672 = vpop.f32.mrf.mxu0
      %v1673 = vpop.f32.mrf.mxu0
      %v1674 = vadd.f32 0.0, %v1673
      %v1675 = vpop.f32.mrf.mxu0
      %1676 = vmatprep.mubr.bf16.mxu0 0
      %1677 = vmatmul.mubr.bf16.gmra.mxu0 %v1590
      %v1678 = vpop.f32.mrf.mxu0
      %v1679 = vadd.f32 0.0, %v1678
      %v1680 = vpop.f32.mrf.mxu0
      %v1681 = vpop.f32.mrf.mxu0
      %v1682 = vadd.f32 0.0, %v1681
      %v1683 = vpop.f32.mrf.mxu0
      %1684 = vmatprep.mubr.bf16.mxu0 0
      %1685 = vmatmul.mubr.bf16.gmra.mxu0 %v1593
      %v1686 = vpop.f32.mrf.mxu0
      %v1687 = vadd.f32 0.0, %v1686
      %v1688 = vpop.f32.mrf.mxu0
      %v1689 = vpop.f32.mrf.mxu0
      %v1690 = vadd.f32 0.0, %v1689
      %v1691 = vpop.f32.mrf.mxu0
      %1692 = vmatprep.mubr.bf16.mxu0 0
      %1693 = vmatmul.mubr.bf16.gmra.mxu0 %v1596
      %v1694 = vpop.f32.mrf.mxu0
      %v1695 = vadd.f32 0.0, %v1694
      %v1696 = vpop.f32.mrf.mxu0
      %v1697 = vpop.f32.mrf.mxu0
      %v1698 = vadd.f32 0.0, %v1697
      %v1699 = vpop.f32.mrf.mxu0
      %1700 = vmatprep.mubr.bf16.mxu0 0
      %1701 = vmatmul.mubr.bf16.gmra.mxu0 %v1599
      %v1702 = vpop.f32.mrf.mxu0
      %v1703 = vadd.f32 0.0, %v1702
      %v1704 = vpop.f32.mrf.mxu0
      %v1705 = vpop.f32.mrf.mxu0
      %v1706 = vadd.f32 0.0, %v1705
      %v1707 = vpop.f32.mrf.mxu0
      %1708 = vdwg.mxu0
      %v1709 = vadd.f32 %v1460, %v1639
      %v1710 = vadd.f32 %v1461, %v1642
      %v1711 = vadd.f32 %v1462, %v1647
      %v1712 = vadd.f32 %v1463, %v1650
      %v1713 = vadd.f32 %v1464, %v1655
      %v1714 = vadd.f32 %v1465, %v1658
      %v1715 = vadd.f32 %v1466, %v1663
      %v1716 = vadd.f32 %v1467, %v1666
      %v1717 = vadd.f32 %v1468, %v1671
      %v1718 = vadd.f32 %v1469, %v1674
      %v1719 = vadd.f32 %v1470, %v1679
      %v1720 = vadd.f32 %v1471, %v1682
      %v1721 = vadd.f32 %v1472, %v1687
      %v1722 = vadd.f32 %v1473, %v1690
      %v1723 = vadd.f32 %v1474, %v1695
      %v1724 = vadd.f32 %v1475, %v1698
      %v1725 = vadd.f32 %v1476, %v1703
      %v1726 = vadd.f32 %v1477, %v1706
      %v1727 = vld [vmem:[#allocation2 + $0x8] sm:$0xc]
      %s1728 = scalar_lea.vmem %s2, 20
      %v1729 = vld [vmem:[%s1728] sm:$0xf]
      %v1731 = vunpack.c.l.b16 %v1727
      %v1732 = vpack.c.b16 %v1278, %v1731
      %vm1733 = vcmask 1045504
      %v1734 = vrot.slane %v1732, 2
      %v1735 = vrot.slane %v1297, 2
      %v1736 = vsel %vm1733, %v1734, %v1735
      %v1737 = vrot.slane %v1298, 2
      %v1738 = vsel %vm1733, %v1735, %v1737
      %v1739 = vrot.slane %v1299, 2
      %v1740 = vsel %vm1733, %v1737, %v1739
      %v1741 = vrot.slane %v1300, 2
      %v1742 = vsel %vm1733, %v1739, %v1741
      %v1743 = vrot.slane %v1301, 2
      %v1744 = vsel %vm1733, %v1741, %v1743
      %v1745 = vrot.slane %v1302, 2
      %v1746 = vsel %vm1733, %v1743, %v1745
      %v1747 = vrot.slane %v1303, 2
      %v1748 = vsel %vm1733, %v1745, %v1747
      %v1749 = vrot.slane %v1304, 2
      %v1750 = vsel %vm1733, %v1747, %v1749
      %v1751 = vrot.slane %v1483, 2
      %v1752 = vsel %vm1733, %v1749, %v1751
      %v1754 = vsel %vm795, %v1736, 0
      %v1757 = vsel %vm795, %v1738, 0
      %v1760 = vsel %vm795, %v1740, 0
      %v1763 = vsel %vm795, %v1742, 0
      %v1766 = vsel %vm795, %v1744, 0
      %v1769 = vsel %vm795, %v1746, 0
      %v1772 = vsel %vm795, %v1748, 0
      %v1775 = vsel %vm795, %v1750, 0
      %v1778 = vsel %vm795, %v1752, 0
      %v1781 = vsel %vm823, %v1729, 0
      %1783 = vmatprep.subr.bf16.mxu0 0
      %1784 = vmatpush1.bf16.msra.mxu0 0
      %1785 = vmatprep.subr.bf16.mxu0 0
      %1786 = vmatpush1.bf16.msra.mxu0 0
      %1787 = vmatprep.subr.bf16.mxu0 0
      %1788 = vmatpush1.bf16.msra.mxu0 0
      %1789 = vmatprep.subr.bf16.mxu0 0
      %1790 = vmatpush1.bf16.msra.mxu0 0
      %1791 = vmatprep.subr.bf16.mxu0 0
      %1792 = vmatpush1.bf16.msra.mxu0 0
      %1793 = vmatprep.subr.bf16.mxu0 0
      %1794 = vmatpush1.bf16.msra.mxu0 0
      %1795 = vmatprep.subr.bf16.mxu0 0
      %1796 = vmatpush1.bf16.msra.mxu0 0
      %1797 = vmatprep.subr.bf16.mxu0 0
      %1798 = vmatpush1.bf16.msra.mxu0 %v1781
      %1799 = vmatprep.subr.bf16.mxu0 0
      %1800 = vmatpush2.bf16.msra.mxu0 0
      %1801 = vmatprep.subr.bf16.mxu0 0
      %1802 = vmatpush2.bf16.msra.mxu0 0
      %1803 = vmatprep.subr.bf16.mxu0 0
      %1804 = vmatpush2.bf16.msra.mxu0 0
      %1805 = vmatprep.subr.bf16.mxu0 0
      %1806 = vmatpush2.bf16.msra.mxu0 0
      %1807 = vmatprep.subr.bf16.mxu0 0
      %1808 = vmatpush2.bf16.msra.mxu0 0
      %1809 = vmatprep.subr.bf16.mxu0 0
      %1810 = vmatpush2.bf16.msra.mxu0 0
      %1811 = vmatprep.subr.bf16.mxu0 0
      %1812 = vmatpush2.bf16.msra.mxu0 0
      %1813 = vmatprep.subr.bf16.mxu0 0
      %1814 = vmatpush2.bf16.msra.mxu0 0
      %1815 = vmatprep.mubr.bf16.mxu0 0
      %1816 = vmatmul.mubr.bf16.gmra.mxu0 %v1754
      %v1817 = vpop.f32.mrf.mxu0
      %v1818 = vadd.f32 0.0, %v1817
      %v1819 = vpop.f32.mrf.mxu0
      %v1820 = vpop.f32.mrf.mxu0
      %v1821 = vadd.f32 0.0, %v1820
      %v1822 = vpop.f32.mrf.mxu0
      %1823 = vmatprep.mubr.bf16.mxu0 0
      %1824 = vmatmul.mubr.bf16.gmra.mxu0 %v1757
      %v1825 = vpop.f32.mrf.mxu0
      %v1826 = vadd.f32 0.0, %v1825
      %v1827 = vpop.f32.mrf.mxu0
      %v1828 = vpop.f32.mrf.mxu0
      %v1829 = vadd.f32 0.0, %v1828
      %v1830 = vpop.f32.mrf.mxu0
      %1831 = vmatprep.mubr.bf16.mxu0 0
      %1832 = vmatmul.mubr.bf16.gmra.mxu0 %v1760
      %v1833 = vpop.f32.mrf.mxu0
      %v1834 = vadd.f32 0.0, %v1833
      %v1835 = vpop.f32.mrf.mxu0
      %v1836 = vpop.f32.mrf.mxu0
      %v1837 = vadd.f32 0.0, %v1836
      %v1838 = vpop.f32.mrf.mxu0
      %1839 = vmatprep.mubr.bf16.mxu0 0
      %1840 = vmatmul.mubr.bf16.gmra.mxu0 %v1763
      %v1841 = vpop.f32.mrf.mxu0
      %v1842 = vadd.f32 0.0, %v1841
      %v1843 = vpop.f32.mrf.mxu0
      %v1844 = vpop.f32.mrf.mxu0
      %v1845 = vadd.f32 0.0, %v1844
      %v1846 = vpop.f32.mrf.mxu0
      %1847 = vmatprep.mubr.bf16.mxu0 0
      %1848 = vmatmul.mubr.bf16.gmra.mxu0 %v1766
      %v1849 = vpop.f32.mrf.mxu0
      %v1850 = vadd.f32 0.0, %v1849
      %v1851 = vpop.f32.mrf.mxu0
      %v1852 = vpop.f32.mrf.mxu0
      %v1853 = vadd.f32 0.0, %v1852
      %v1854 = vpop.f32.mrf.mxu0
      %1855 = vmatprep.mubr.bf16.mxu0 0
      %1856 = vmatmul.mubr.bf16.gmra.mxu0 %v1769
      %v1857 = vpop.f32.mrf.mxu0
      %v1858 = vadd.f32 0.0, %v1857
      %v1859 = vpop.f32.mrf.mxu0
      %v1860 = vpop.f32.mrf.mxu0
      %v1861 = vadd.f32 0.0, %v1860
      %v1862 = vpop.f32.mrf.mxu0
      %1863 = vmatprep.mubr.bf16.mxu0 0
      %1864 = vmatmul.mubr.bf16.gmra.mxu0 %v1772
      %v1865 = vpop.f32.mrf.mxu0
      %v1866 = vadd.f32 0.0, %v1865
      %v1867 = vpop.f32.mrf.mxu0
      %v1868 = vpop.f32.mrf.mxu0
      %v1869 = vadd.f32 0.0, %v1868
      %v1870 = vpop.f32.mrf.mxu0
      %1871 = vmatprep.mubr.bf16.mxu0 0
      %1872 = vmatmul.mubr.bf16.gmra.mxu0 %v1775
      %v1873 = vpop.f32.mrf.mxu0
      %v1874 = vadd.f32 0.0, %v1873
      %v1875 = vpop.f32.mrf.mxu0
      %v1876 = vpop.f32.mrf.mxu0
      %v1877 = vadd.f32 0.0, %v1876
      %v1878 = vpop.f32.mrf.mxu0
      %1879 = vmatprep.mubr.bf16.mxu0 0
      %1880 = vmatmul.mubr.bf16.gmra.mxu0 %v1778
      %v1881 = vpop.f32.mrf.mxu0
      %v1882 = vadd.f32 0.0, %v1881
      %v1883 = vpop.f32.mrf.mxu0
      %v1884 = vpop.f32.mrf.mxu0
      %v1885 = vadd.f32 0.0, %v1884
      %v1886 = vpop.f32.mrf.mxu0
      %1887 = vdwg.mxu0
      %v1888 = vadd.f32 %v1709, %v1818
      %v1889 = vadd.f32 %v1710, %v1821
      %v1890 = vadd.f32 %v1711, %v1826
      %v1891 = vadd.f32 %v1712, %v1829
      %v1892 = vadd.f32 %v1713, %v1834
      %v1893 = vadd.f32 %v1714, %v1837
      %v1894 = vadd.f32 %v1715, %v1842
      %v1895 = vadd.f32 %v1716, %v1845
      %v1896 = vadd.f32 %v1717, %v1850
      %v1897 = vadd.f32 %v1718, %v1853
      %v1898 = vadd.f32 %v1719, %v1858
      %v1899 = vadd.f32 %v1720, %v1861
      %v1900 = vadd.f32 %v1721, %v1866
      %v1901 = vadd.f32 %v1722, %v1869
      %v1902 = vadd.f32 %v1723, %v1874
      %v1903 = vadd.f32 %v1724, %v1877
      %v1904 = vadd.f32 %v1725, %v1882
      %v1905 = vadd.f32 %v1726, %v1885
      %v1906 = vld [vmem:[#allocation2 + $0x10] sm:$0xc]
      %v1907 = vld [vmem:[#allocation2 + $0x14] sm:$0xf]
      %v1908 = vld [vmem:[#allocation2 + $0x18] sm:$0xf]
      %v1909 = vld [vmem:[#allocation2 + $0x1c] sm:$0xf]
      %v1910 = vld [vmem:[#allocation2 + $0x20] sm:$0xf]
      %v1911 = vld [vmem:[#allocation2 + $0x24] sm:$0xf]
      %v1912 = vld [vmem:[#allocation2 + $0x28] sm:$0xf]
      %v1913 = vld [vmem:[#allocation2 + $0x2c] sm:$0xf]
      %v1914 = vld [vmem:[#allocation2 + $0x30] sm:$0xf]
      %v1915 = vld [vmem:[#allocation2 + $0x34] sm:$0xf]
      %v1916 = vld [vmem:[#allocation2 + $0x38] sm:$0xf]
      %v1917 = vld [vmem:[#allocation2 + $0x3c] sm:$0xf]
      %v1918 = vld [vmem:[#allocation2 + $0x40] sm:$0xf]
      %v1919 = vld [vmem:[#allocation2 + $0x44] sm:$0xf]
      %v1920 = vld [vmem:[#allocation2 + $0x48] sm:$0xf]
      %v1921 = vld [vmem:[#allocation2 + $0x4c] sm:$0xf]
      %v1922 = vld [vmem:[#allocation2 + $0x50] sm:$0xf]
      %v1923 = vld [vmem:[#allocation2 + $0x54] sm:$0xf]
      %v1924 = vld [vmem:[#allocation2 + $0x58] sm:$0x3]
      %s1925 = scalar_lea.vmem %s2, 24
      %v1926 = vld [vmem:[%s1925] sm:$0xf]
      %v1946 = vunpack.c.l.b16 %v1906
      %v1947 = vunpack.c.l.b16 %v1907
      %v1948 = vunpack.c.l.b16 %v1908
      %v1949 = vunpack.c.l.b16 %v1909
      %v1950 = vunpack.c.l.b16 %v1910
      %v1951 = vunpack.c.l.b16 %v1911
      %v1952 = vunpack.c.l.b16 %v1912
      %v1953 = vunpack.c.l.b16 %v1913
      %v1954 = vunpack.c.l.b16 %v1914
      %v1955 = vunpack.c.l.b16 %v1915
      %v1956 = vunpack.c.l.b16 %v1916
      %v1957 = vunpack.c.l.b16 %v1917
      %v1958 = vunpack.c.l.b16 %v1918
      %v1959 = vunpack.c.l.b16 %v1919
      %v1960 = vunpack.c.l.b16 %v1920
      %v1961 = vunpack.c.l.b16 %v1921
      %v1962 = vunpack.c.l.b16 %v1922
      %v1963 = vunpack.c.l.b16 %v1923
      %v1964 = vunpack.c.l.b16 %v1924
      %v1965 = vpack.c.b16 %v1947, %v1946
      %v1966 = vpack.c.b16 %v1949, %v1948
      %v1967 = vpack.c.b16 %v1951, %v1950
      %v1968 = vpack.c.b16 %v1953, %v1952
      %v1969 = vpack.c.b16 %v1955, %v1954
      %v1970 = vpack.c.b16 %v1957, %v1956
      %v1971 = vpack.c.b16 %v1959, %v1958
      %v1972 = vpack.c.b16 %v1961, %v1960
      %v1973 = vpack.c.b16 %v1963, %v1962
      %v1974 = vpack.c.b16 %v1964, %v1964
      %v1975 = vrot.slane %v1965, 2
      %v1976 = vrot.slane %v1966, 2
      %v1977 = vsel %vm1733, %v1975, %v1976
      %v1978 = vrot.slane %v1967, 2
      %v1979 = vsel %vm1733, %v1976, %v1978
      %v1980 = vrot.slane %v1968, 2
      %v1981 = vsel %vm1733, %v1978, %v1980
      %v1982 = vrot.slane %v1969, 2
      %v1983 = vsel %vm1733, %v1980, %v1982
      %v1984 = vrot.slane %v1970, 2
      %v1985 = vsel %vm1733, %v1982, %v1984
      %v1986 = vrot.slane %v1971, 2
      %v1987 = vsel %vm1733, %v1984, %v1986
      %v1988 = vrot.slane %v1972, 2
      %v1989 = vsel %vm1733, %v1986, %v1988
      %v1990 = vrot.slane %v1973, 2
      %v1991 = vsel %vm1733, %v1988, %v1990
      %v1992 = vrot.slane %v1974, 2
      %v1993 = vsel %vm1733, %v1990, %v1992
      %v1995 = vsel %vm795, %v1977, 0
      %v1998 = vsel %vm795, %v1979, 0
      %v2001 = vsel %vm795, %v1981, 0
      %v2004 = vsel %vm795, %v1983, 0
      %v2007 = vsel %vm795, %v1985, 0
      %v2010 = vsel %vm795, %v1987, 0
      %v2013 = vsel %vm795, %v1989, 0
      %v2016 = vsel %vm795, %v1991, 0
      %v2019 = vsel %vm795, %v1993, 0
      %v2022 = vsel %vm823, %v1926, 0
      %2024 = vmatprep.subr.bf16.mxu0 0
      %2025 = vmatpush1.bf16.msra.mxu0 0
      %2026 = vmatprep.subr.bf16.mxu0 0
      %2027 = vmatpush1.bf16.msra.mxu0 0
      %2028 = vmatprep.subr.bf16.mxu0 0
      %2029 = vmatpush1.bf16.msra.mxu0 0
      %2030 = vmatprep.subr.bf16.mxu0 0
      %2031 = vmatpush1.bf16.msra.mxu0 0
      %2032 = vmatprep.subr.bf16.mxu0 0
      %2033 = vmatpush1.bf16.msra.mxu0 0
      %2034 = vmatprep.subr.bf16.mxu0 0
      %2035 = vmatpush1.bf16.msra.mxu0 0
      %2036 = vmatprep.subr.bf16.mxu0 0
      %2037 = vmatpush1.bf16.msra.mxu0 0
      %2038 = vmatprep.subr.bf16.mxu0 0
      %2039 = vmatpush1.bf16.msra.mxu0 %v2022
      %2040 = vmatprep.subr.bf16.mxu0 0
      %2041 = vmatpush2.bf16.msra.mxu0 0
      %2042 = vmatprep.subr.bf16.mxu0 0
      %2043 = vmatpush2.bf16.msra.mxu0 0
      %2044 = vmatprep.subr.bf16.mxu0 0
      %2045 = vmatpush2.bf16.msra.mxu0 0
      %2046 = vmatprep.subr.bf16.mxu0 0
      %2047 = vmatpush2.bf16.msra.mxu0 0
      %2048 = vmatprep.subr.bf16.mxu0 0
      %2049 = vmatpush2.bf16.msra.mxu0 0
      %2050 = vmatprep.subr.bf16.mxu0 0
      %2051 = vmatpush2.bf16.msra.mxu0 0
      %2052 = vmatprep.subr.bf16.mxu0 0
      %2053 = vmatpush2.bf16.msra.mxu0 0
      %2054 = vmatprep.subr.bf16.mxu0 0
      %2055 = vmatpush2.bf16.msra.mxu0 0
      %2056 = vmatprep.mubr.bf16.mxu0 0
      %2057 = vmatmul.mubr.bf16.gmra.mxu0 %v1995
      %v2058 = vpop.f32.mrf.mxu0
      %v2059 = vadd.f32 0.0, %v2058
      %v2060 = vpop.f32.mrf.mxu0
      %v2061 = vpop.f32.mrf.mxu0
      %v2062 = vadd.f32 0.0, %v2061
      %v2063 = vpop.f32.mrf.mxu0
      %2064 = vmatprep.mubr.bf16.mxu0 0
      %2065 = vmatmul.mubr.bf16.gmra.mxu0 %v1998
      %v2066 = vpop.f32.mrf.mxu0
      %v2067 = vadd.f32 0.0, %v2066
      %v2068 = vpop.f32.mrf.mxu0
      %v2069 = vpop.f32.mrf.mxu0
      %v2070 = vadd.f32 0.0, %v2069
      %v2071 = vpop.f32.mrf.mxu0
      %2072 = vmatprep.mubr.bf16.mxu0 0
      %2073 = vmatmul.mubr.bf16.gmra.mxu0 %v2001
      %v2074 = vpop.f32.mrf.mxu0
      %v2075 = vadd.f32 0.0, %v2074
      %v2076 = vpop.f32.mrf.mxu0
      %v2077 = vpop.f32.mrf.mxu0
      %v2078 = vadd.f32 0.0, %v2077
      %v2079 = vpop.f32.mrf.mxu0
      %2080 = vmatprep.mubr.bf16.mxu0 0
      %2081 = vmatmul.mubr.bf16.gmra.mxu0 %v2004
      %v2082 = vpop.f32.mrf.mxu0
      %v2083 = vadd.f32 0.0, %v2082
      %v2084 = vpop.f32.mrf.mxu0
      %v2085 = vpop.f32.mrf.mxu0
      %v2086 = vadd.f32 0.0, %v2085
      %v2087 = vpop.f32.mrf.mxu0
      %2088 = vmatprep.mubr.bf16.mxu0 0
      %2089 = vmatmul.mubr.bf16.gmra.mxu0 %v2007
      %v2090 = vpop.f32.mrf.mxu0
      %v2091 = vadd.f32 0.0, %v2090
      %v2092 = vpop.f32.mrf.mxu0
      %v2093 = vpop.f32.mrf.mxu0
      %v2094 = vadd.f32 0.0, %v2093
      %v2095 = vpop.f32.mrf.mxu0
      %2096 = vmatprep.mubr.bf16.mxu0 0
      %2097 = vmatmul.mubr.bf16.gmra.mxu0 %v2010
      %v2098 = vpop.f32.mrf.mxu0
      %v2099 = vadd.f32 0.0, %v2098
      %v2100 = vpop.f32.mrf.mxu0
      %v2101 = vpop.f32.mrf.mxu0
      %v2102 = vadd.f32 0.0, %v2101
      %v2103 = vpop.f32.mrf.mxu0
      %2104 = vmatprep.mubr.bf16.mxu0 0
      %2105 = vmatmul.mubr.bf16.gmra.mxu0 %v2013
      %v2106 = vpop.f32.mrf.mxu0
      %v2107 = vadd.f32 0.0, %v2106
      %v2108 = vpop.f32.mrf.mxu0
      %v2109 = vpop.f32.mrf.mxu0
      %v2110 = vadd.f32 0.0, %v2109
      %v2111 = vpop.f32.mrf.mxu0
      %2112 = vmatprep.mubr.bf16.mxu0 0
      %2113 = vmatmul.mubr.bf16.gmra.mxu0 %v2016
      %v2114 = vpop.f32.mrf.mxu0
      %v2115 = vadd.f32 0.0, %v2114
      %v2116 = vpop.f32.mrf.mxu0
      %v2117 = vpop.f32.mrf.mxu0
      %v2118 = vadd.f32 0.0, %v2117
      %v2119 = vpop.f32.mrf.mxu0
      %2120 = vmatprep.mubr.bf16.mxu0 0
      %2121 = vmatmul.mubr.bf16.gmra.mxu0 %v2019
      %v2122 = vpop.f32.mrf.mxu0
      %v2123 = vadd.f32 0.0, %v2122
      %v2124 = vpop.f32.mrf.mxu0
      %v2125 = vpop.f32.mrf.mxu0
      %v2126 = vadd.f32 0.0, %v2125
      %v2127 = vpop.f32.mrf.mxu0
      %2128 = vdwg.mxu0
      %v2129 = vadd.f32 %v1888, %v2059
      %v2130 = vadd.f32 %v1889, %v2062
      %v2131 = vadd.f32 %v1890, %v2067
      %v2132 = vadd.f32 %v1891, %v2070
      %v2133 = vadd.f32 %v1892, %v2075
      %v2134 = vadd.f32 %v1893, %v2078
      %v2135 = vadd.f32 %v1894, %v2083
      %v2136 = vadd.f32 %v1895, %v2086
      %v2137 = vadd.f32 %v1896, %v2091
      %v2138 = vadd.f32 %v1897, %v2094
      %v2139 = vadd.f32 %v1898, %v2099
      %v2140 = vadd.f32 %v1899, %v2102
      %v2141 = vadd.f32 %v1900, %v2107
      %v2142 = vadd.f32 %v1901, %v2110
      %v2143 = vadd.f32 %v1902, %v2115
      %v2144 = vadd.f32 %v1903, %v2118
      %v2145 = vadd.f32 %v1904, %v2123
      %v2146 = vadd.f32 %v1905, %v2126
      %v2147 = vld [vmem:[#allocation2 + $0x58] sm:$0x7]
      %s2148 = scalar_lea.vmem %s2, 28
      %v2149 = vld [vmem:[%s2148] sm:$0xf]
      %v2151 = vunpack.c.l.b16 %v2147
      %v2152 = vpack.c.b16 %v2151, %v2151
      %vm2153 = vsmask.f32 5376
      %v2155 = vshrl.u32 %v1965, 16
      %v2157 = vrot.slane %v2155, 2
      %v2158 = vshll.u32 %v1965, 16
      %v2160 = vrot.slane %v2158, 3
      %v2161 = vor.u32 %v2157, %v2160
      %v2163 = vshrl.u32 %v1966, 16
      %v2165 = vrot.slane %v2163, 2
      %v2166 = vshll.u32 %v1966, 16
      %v2168 = vrot.slane %v2166, 3
      %v2169 = vor.u32 %v2165, %v2168
      %v2170 = vsel %vm2153, %v2161, %v2169
      %v2172 = vshrl.u32 %v1967, 16
      %v2174 = vrot.slane %v2172, 2
      %v2175 = vshll.u32 %v1967, 16
      %v2177 = vrot.slane %v2175, 3
      %v2178 = vor.u32 %v2174, %v2177
      %v2179 = vsel %vm2153, %v2169, %v2178
      %v2181 = vshrl.u32 %v1968, 16
      %v2183 = vrot.slane %v2181, 2
      %v2184 = vshll.u32 %v1968, 16
      %v2186 = vrot.slane %v2184, 3
      %v2187 = vor.u32 %v2183, %v2186
      %v2188 = vsel %vm2153, %v2178, %v2187
      %v2190 = vshrl.u32 %v1969, 16
      %v2192 = vrot.slane %v2190, 2
      %v2193 = vshll.u32 %v1969, 16
      %v2195 = vrot.slane %v2193, 3
      %v2196 = vor.u32 %v2192, %v2195
      %v2197 = vsel %vm2153, %v2187, %v2196
      %v2199 = vshrl.u32 %v1970, 16
      %v2201 = vrot.slane %v2199, 2
      %v2202 = vshll.u32 %v1970, 16
      %v2204 = vrot.slane %v2202, 3
      %v2205 = vor.u32 %v2201, %v2204
      %v2206 = vsel %vm2153, %v2196, %v2205
      %v2208 = vshrl.u32 %v1971, 16
      %v2210 = vrot.slane %v2208, 2
      %v2211 = vshll.u32 %v1971, 16
      %v2213 = vrot.slane %v2211, 3
      %v2214 = vor.u32 %v2210, %v2213
      %v2215 = vsel %vm2153, %v2205, %v2214
      %v2217 = vshrl.u32 %v1972, 16
      %v2219 = vrot.slane %v2217, 2
      %v2220 = vshll.u32 %v1972, 16
      %v2222 = vrot.slane %v2220, 3
      %v2223 = vor.u32 %v2219, %v2222
      %v2224 = vsel %vm2153, %v2214, %v2223
      %v2226 = vshrl.u32 %v1973, 16
      %v2228 = vrot.slane %v2226, 2
      %v2229 = vshll.u32 %v1973, 16
      %v2231 = vrot.slane %v2229, 3
      %v2232 = vor.u32 %v2228, %v2231
      %v2233 = vsel %vm2153, %v2223, %v2232
      %v2235 = vshrl.u32 %v2152, 16
      %v2237 = vrot.slane %v2235, 2
      %v2238 = vshll.u32 %v2152, 16
      %v2240 = vrot.slane %v2238, 3
      %v2241 = vor.u32 %v2237, %v2240
      %v2242 = vsel %vm2153, %v2232, %v2241
      %v2244 = vsel %vm795, %v2170, 0
      %v2247 = vsel %vm795, %v2179, 0
      %v2250 = vsel %vm795, %v2188, 0
      %v2253 = vsel %vm795, %v2197, 0
      %v2256 = vsel %vm795, %v2206, 0
      %v2259 = vsel %vm795, %v2215, 0
      %v2262 = vsel %vm795, %v2224, 0
      %v2265 = vsel %vm795, %v2233, 0
      %v2268 = vsel %vm795, %v2242, 0
      %v2271 = vsel %vm823, %v2149, 0
      %2273 = vmatprep.subr.bf16.mxu0 0
      %2274 = vmatpush1.bf16.msra.mxu0 0
      %2275 = vmatprep.subr.bf16.mxu0 0
      %2276 = vmatpush1.bf16.msra.mxu0 0
      %2277 = vmatprep.subr.bf16.mxu0 0
      %2278 = vmatpush1.bf16.msra.mxu0 0
      %2279 = vmatprep.subr.bf16.mxu0 0
      %2280 = vmatpush1.bf16.msra.mxu0 0
      %2281 = vmatprep.subr.bf16.mxu0 0
      %2282 = vmatpush1.bf16.msra.mxu0 0
      %2283 = vmatprep.subr.bf16.mxu0 0
      %2284 = vmatpush1.bf16.msra.mxu0 0
      %2285 = vmatprep.subr.bf16.mxu0 0
      %2286 = vmatpush1.bf16.msra.mxu0 0
      %2287 = vmatprep.subr.bf16.mxu0 0
      %2288 = vmatpush1.bf16.msra.mxu0 %v2271
      %2289 = vmatprep.subr.bf16.mxu0 0
      %2290 = vmatpush2.bf16.msra.mxu0 0
      %2291 = vmatprep.subr.bf16.mxu0 0
      %2292 = vmatpush2.bf16.msra.mxu0 0
      %2293 = vmatprep.subr.bf16.mxu0 0
      %2294 = vmatpush2.bf16.msra.mxu0 0
      %2295 = vmatprep.subr.bf16.mxu0 0
      %2296 = vmatpush2.bf16.msra.mxu0 0
      %2297 = vmatprep.subr.bf16.mxu0 0
      %2298 = vmatpush2.bf16.msra.mxu0 0
      %2299 = vmatprep.subr.bf16.mxu0 0
      %2300 = vmatpush2.bf16.msra.mxu0 0
      %2301 = vmatprep.subr.bf16.mxu0 0
      %2302 = vmatpush2.bf16.msra.mxu0 0
      %2303 = vmatprep.subr.bf16.mxu0 0
      %2304 = vmatpush2.bf16.msra.mxu0 0
      %2305 = vmatprep.mubr.bf16.mxu0 0
      %2306 = vmatmul.mubr.bf16.gmra.mxu0 %v2244
      %v2307 = vpop.f32.mrf.mxu0
      %v2308 = vadd.f32 0.0, %v2307
      %v2309 = vpop.f32.mrf.mxu0
      %v2310 = vpop.f32.mrf.mxu0
      %v2311 = vadd.f32 0.0, %v2310
      %v2312 = vpop.f32.mrf.mxu0
      %2313 = vmatprep.mubr.bf16.mxu0 0
      %2314 = vmatmul.mubr.bf16.gmra.mxu0 %v2247
      %v2315 = vpop.f32.mrf.mxu0
      %v2316 = vadd.f32 0.0, %v2315
      %v2317 = vpop.f32.mrf.mxu0
      %v2318 = vpop.f32.mrf.mxu0
      %v2319 = vadd.f32 0.0, %v2318
      %v2320 = vpop.f32.mrf.mxu0
      %2321 = vmatprep.mubr.bf16.mxu0 0
      %2322 = vmatmul.mubr.bf16.gmra.mxu0 %v2250
      %v2323 = vpop.f32.mrf.mxu0
      %v2324 = vadd.f32 0.0, %v2323
      %v2325 = vpop.f32.mrf.mxu0
      %v2326 = vpop.f32.mrf.mxu0
      %v2327 = vadd.f32 0.0, %v2326
      %v2328 = vpop.f32.mrf.mxu0
      %2329 = vmatprep.mubr.bf16.mxu0 0
      %2330 = vmatmul.mubr.bf16.gmra.mxu0 %v2253
      %v2331 = vpop.f32.mrf.mxu0
      %v2332 = vadd.f32 0.0, %v2331
      %v2333 = vpop.f32.mrf.mxu0
      %v2334 = vpop.f32.mrf.mxu0
      %v2335 = vadd.f32 0.0, %v2334
      %v2336 = vpop.f32.mrf.mxu0
      %2337 = vmatprep.mubr.bf16.mxu0 0
      %2338 = vmatmul.mubr.bf16.gmra.mxu0 %v2256
      %v2339 = vpop.f32.mrf.mxu0
      %v2340 = vadd.f32 0.0, %v2339
      %v2341 = vpop.f32.mrf.mxu0
      %v2342 = vpop.f32.mrf.mxu0
      %v2343 = vadd.f32 0.0, %v2342
      %v2344 = vpop.f32.mrf.mxu0
      %2345 = vmatprep.mubr.bf16.mxu0 0
      %2346 = vmatmul.mubr.bf16.gmra.mxu0 %v2259
      %v2347 = vpop.f32.mrf.mxu0
      %v2348 = vadd.f32 0.0, %v2347
      %v2349 = vpop.f32.mrf.mxu0
      %v2350 = vpop.f32.mrf.mxu0
      %v2351 = vadd.f32 0.0, %v2350
      %v2352 = vpop.f32.mrf.mxu0
      %2353 = vmatprep.mubr.bf16.mxu0 0
      %2354 = vmatmul.mubr.bf16.gmra.mxu0 %v2262
      %v2355 = vpop.f32.mrf.mxu0
      %v2356 = vadd.f32 0.0, %v2355
      %v2357 = vpop.f32.mrf.mxu0
      %v2358 = vpop.f32.mrf.mxu0
      %v2359 = vadd.f32 0.0, %v2358
      %v2360 = vpop.f32.mrf.mxu0
      %2361 = vmatprep.mubr.bf16.mxu0 0
      %2362 = vmatmul.mubr.bf16.gmra.mxu0 %v2265
      %v2363 = vpop.f32.mrf.mxu0
      %v2364 = vadd.f32 0.0, %v2363
      %v2365 = vpop.f32.mrf.mxu0
      %v2366 = vpop.f32.mrf.mxu0
      %v2367 = vadd.f32 0.0, %v2366
      %v2368 = vpop.f32.mrf.mxu0
      %2369 = vmatprep.mubr.bf16.mxu0 0
      %2370 = vmatmul.mubr.bf16.gmra.mxu0 %v2268
      %v2371 = vpop.f32.mrf.mxu0
      %v2372 = vadd.f32 0.0, %v2371
      %v2373 = vpop.f32.mrf.mxu0
      %v2374 = vpop.f32.mrf.mxu0
      %v2375 = vadd.f32 0.0, %v2374
      %v2376 = vpop.f32.mrf.mxu0
      %2377 = vdwg.mxu0
      %v2378 = vadd.f32 %v2129, %v2308
      %v2379 = vadd.f32 %v2130, %v2311
      %v2380 = vadd.f32 %v2131, %v2316
      %v2381 = vadd.f32 %v2132, %v2319
      %v2382 = vadd.f32 %v2133, %v2324
      %v2383 = vadd.f32 %v2134, %v2327
      %v2384 = vadd.f32 %v2135, %v2332
      %v2385 = vadd.f32 %v2136, %v2335
      %v2386 = vadd.f32 %v2137, %v2340
      %v2387 = vadd.f32 %v2138, %v2343
      %v2388 = vadd.f32 %v2139, %v2348
      %v2389 = vadd.f32 %v2140, %v2351
      %v2390 = vadd.f32 %v2141, %v2356
      %v2391 = vadd.f32 %v2142, %v2359
      %v2392 = vadd.f32 %v2143, %v2364
      %v2393 = vadd.f32 %v2144, %v2367
      %v2394 = vadd.f32 %v2145, %v2372
      %v2395 = vadd.f32 %v2146, %v2375
      %v2396 = vld [vmem:[#allocation2 + $0x10] sm:$0x8]
      %s2397 = scalar_lea.vmem %s2, 32
      %v2398 = vld [vmem:[%s2397] sm:$0xf]
      %v2400 = vunpack.c.l.b16 %v2396
      %v2401 = vpack.c.b16 %v1947, %v2400
      %vm2402 = vcmask 1044480
      %v2403 = vrot.slane %v2401, 3
      %v2404 = vrot.slane %v1966, 3
      %v2405 = vsel %vm2402, %v2403, %v2404
      %v2406 = vrot.slane %v1967, 3
      %v2407 = vsel %vm2402, %v2404, %v2406
      %v2408 = vrot.slane %v1968, 3
      %v2409 = vsel %vm2402, %v2406, %v2408
      %v2410 = vrot.slane %v1969, 3
      %v2411 = vsel %vm2402, %v2408, %v2410
      %v2412 = vrot.slane %v1970, 3
      %v2413 = vsel %vm2402, %v2410, %v2412
      %v2414 = vrot.slane %v1971, 3
      %v2415 = vsel %vm2402, %v2412, %v2414
      %v2416 = vrot.slane %v1972, 3
      %v2417 = vsel %vm2402, %v2414, %v2416
      %v2418 = vrot.slane %v1973, 3
      %v2419 = vsel %vm2402, %v2416, %v2418
      %v2420 = vrot.slane %v2152, 3
      %v2421 = vsel %vm2402, %v2418, %v2420
      %v2423 = vsel %vm795, %v2405, 0
      %v2426 = vsel %vm795, %v2407, 0
      %v2429 = vsel %vm795, %v2409, 0
      %v2432 = vsel %vm795, %v2411, 0
      %v2435 = vsel %vm795, %v2413, 0
      %v2438 = vsel %vm795, %v2415, 0
      %v2441 = vsel %vm795, %v2417, 0
      %v2444 = vsel %vm795, %v2419, 0
      %v2447 = vsel %vm795, %v2421, 0
      %v2450 = vsel %vm823, %v2398, 0
      %2452 = vmatprep.subr.bf16.mxu0 0
      %2453 = vmatpush1.bf16.msra.mxu0 0
      %2454 = vmatprep.subr.bf16.mxu0 0
      %2455 = vmatpush1.bf16.msra.mxu0 0
      %2456 = vmatprep.subr.bf16.mxu0 0
      %2457 = vmatpush1.bf16.msra.mxu0 0
      %2458 = vmatprep.subr.bf16.mxu0 0
      %2459 = vmatpush1.bf16.msra.mxu0 0
      %2460 = vmatprep.subr.bf16.mxu0 0
      %2461 = vmatpush1.bf16.msra.mxu0 0
      %2462 = vmatprep.subr.bf16.mxu0 0
      %2463 = vmatpush1.bf16.msra.mxu0 0
      %2464 = vmatprep.subr.bf16.mxu0 0
      %2465 = vmatpush1.bf16.msra.mxu0 0
      %2466 = vmatprep.subr.bf16.mxu0 0
      %2467 = vmatpush1.bf16.msra.mxu0 %v2450
      %2468 = vmatprep.subr.bf16.mxu0 0
      %2469 = vmatpush2.bf16.msra.mxu0 0
      %2470 = vmatprep.subr.bf16.mxu0 0
      %2471 = vmatpush2.bf16.msra.mxu0 0
      %2472 = vmatprep.subr.bf16.mxu0 0
      %2473 = vmatpush2.bf16.msra.mxu0 0
      %2474 = vmatprep.subr.bf16.mxu0 0
      %2475 = vmatpush2.bf16.msra.mxu0 0
      %2476 = vmatprep.subr.bf16.mxu0 0
      %2477 = vmatpush2.bf16.msra.mxu0 0
      %2478 = vmatprep.subr.bf16.mxu0 0
      %2479 = vmatpush2.bf16.msra.mxu0 0
      %2480 = vmatprep.subr.bf16.mxu0 0
      %2481 = vmatpush2.bf16.msra.mxu0 0
      %2482 = vmatprep.subr.bf16.mxu0 0
      %2483 = vmatpush2.bf16.msra.mxu0 0
      %2484 = vmatprep.mubr.bf16.mxu0 0
      %2485 = vmatmul.mubr.bf16.gmra.mxu0 %v2423
      %v2486 = vpop.f32.mrf.mxu0
      %v2487 = vadd.f32 0.0, %v2486
      %v2488 = vpop.f32.mrf.mxu0
      %v2489 = vpop.f32.mrf.mxu0
      %v2490 = vadd.f32 0.0, %v2489
      %v2491 = vpop.f32.mrf.mxu0
      %2492 = vmatprep.mubr.bf16.mxu0 0
      %2493 = vmatmul.mubr.bf16.gmra.mxu0 %v2426
      %v2494 = vpop.f32.mrf.mxu0
      %v2495 = vadd.f32 0.0, %v2494
      %v2496 = vpop.f32.mrf.mxu0
      %v2497 = vpop.f32.mrf.mxu0
      %v2498 = vadd.f32 0.0, %v2497
      %v2499 = vpop.f32.mrf.mxu0
      %2500 = vmatprep.mubr.bf16.mxu0 0
      %2501 = vmatmul.mubr.bf16.gmra.mxu0 %v2429
      %v2502 = vpop.f32.mrf.mxu0
      %v2503 = vadd.f32 0.0, %v2502
      %v2504 = vpop.f32.mrf.mxu0
      %v2505 = vpop.f32.mrf.mxu0
      %v2506 = vadd.f32 0.0, %v2505
      %v2507 = vpop.f32.mrf.mxu0
      %2508 = vmatprep.mubr.bf16.mxu0 0
      %2509 = vmatmul.mubr.bf16.gmra.mxu0 %v2432
      %v2510 = vpop.f32.mrf.mxu0
      %v2511 = vadd.f32 0.0, %v2510
      %v2512 = vpop.f32.mrf.mxu0
      %v2513 = vpop.f32.mrf.mxu0
      %v2514 = vadd.f32 0.0, %v2513
      %v2515 = vpop.f32.mrf.mxu0
      %2516 = vmatprep.mubr.bf16.mxu0 0
      %2517 = vmatmul.mubr.bf16.gmra.mxu0 %v2435
      %v2518 = vpop.f32.mrf.mxu0
      %v2519 = vadd.f32 0.0, %v2518
      %v2520 = vpop.f32.mrf.mxu0
      %v2521 = vpop.f32.mrf.mxu0
      %v2522 = vadd.f32 0.0, %v2521
      %v2523 = vpop.f32.mrf.mxu0
      %2524 = vmatprep.mubr.bf16.mxu0 0
      %2525 = vmatmul.mubr.bf16.gmra.mxu0 %v2438
      %v2526 = vpop.f32.mrf.mxu0
      %v2527 = vadd.f32 0.0, %v2526
      %v2528 = vpop.f32.mrf.mxu0
      %v2529 = vpop.f32.mrf.mxu0
      %v2530 = vadd.f32 0.0, %v2529
      %v2531 = vpop.f32.mrf.mxu0
      %2532 = vmatprep.mubr.bf16.mxu0 0
      %2533 = vmatmul.mubr.bf16.gmra.mxu0 %v2441
      %v2534 = vpop.f32.mrf.mxu0
      %v2535 = vadd.f32 0.0, %v2534
      %v2536 = vpop.f32.mrf.mxu0
      %v2537 = vpop.f32.mrf.mxu0
      %v2538 = vadd.f32 0.0, %v2537
      %v2539 = vpop.f32.mrf.mxu0
      %2540 = vmatprep.mubr.bf16.mxu0 0
      %2541 = vmatmul.mubr.bf16.gmra.mxu0 %v2444
      %v2542 = vpop.f32.mrf.mxu0
      %v2543 = vadd.f32 0.0, %v2542
      %v2544 = vpop.f32.mrf.mxu0
      %v2545 = vpop.f32.mrf.mxu0
      %v2546 = vadd.f32 0.0, %v2545
      %v2547 = vpop.f32.mrf.mxu0
      %2548 = vmatprep.mubr.bf16.mxu0 0
      %2549 = vmatmul.mubr.bf16.gmra.mxu0 %v2447
      %v2550 = vpop.f32.mrf.mxu0
      %v2551 = vadd.f32 0.0, %v2550
      %v2552 = vpop.f32.mrf.mxu0
      %v2553 = vpop.f32.mrf.mxu0
      %v2554 = vadd.f32 0.0, %v2553
      %v2555 = vpop.f32.mrf.mxu0
      %2556 = vdwg.mxu0
      %v2557 = vadd.f32 %v2378, %v2487
      %v2558 = vadd.f32 %v2379, %v2490
      %v2559 = vadd.f32 %v2380, %v2495
      %v2560 = vadd.f32 %v2381, %v2498
      %v2561 = vadd.f32 %v2382, %v2503
      %v2562 = vadd.f32 %v2383, %v2506
      %v2563 = vadd.f32 %v2384, %v2511
      %v2564 = vadd.f32 %v2385, %v2514
      %v2565 = vadd.f32 %v2386, %v2519
      %v2566 = vadd.f32 %v2387, %v2522
      %v2567 = vadd.f32 %v2388, %v2527
      %v2568 = vadd.f32 %v2389, %v2530
      %v2569 = vadd.f32 %v2390, %v2535
      %v2570 = vadd.f32 %v2391, %v2538
      %v2571 = vadd.f32 %v2392, %v2543
      %v2572 = vadd.f32 %v2393, %v2546
      %v2573 = vadd.f32 %v2394, %v2551
      %v2574 = vadd.f32 %v2395, %v2554
      %v2575 = vld [vmem:[%s3] sm:$0x1]
      %v2577 = vlaneseq
      %v2578 = vshrl.u32 %v2577, 7
      %v2579 = vsub.s32 0, %v2578
      %v2580 = vrot.slane %v2575, %v2579
      %v2582 = vadd.f32 %v2557, %v2580
      %v2583 = vadd.f32 %v2558, %v2580
      %v2584 = vadd.f32 %v2559, %v2580
      %v2585 = vadd.f32 %v2560, %v2580
      %v2586 = vadd.f32 %v2561, %v2580
      %v2587 = vadd.f32 %v2562, %v2580
      %v2588 = vadd.f32 %v2563, %v2580
      %v2589 = vadd.f32 %v2564, %v2580
      %v2590 = vadd.f32 %v2565, %v2580
      %v2591 = vadd.f32 %v2566, %v2580
      %v2592 = vadd.f32 %v2567, %v2580
      %v2593 = vadd.f32 %v2568, %v2580
      %v2594 = vadd.f32 %v2569, %v2580
      %v2595 = vadd.f32 %v2570, %v2580
      %v2596 = vadd.f32 %v2571, %v2580
      %v2597 = vadd.f32 %v2572, %v2580
      %v2598 = vadd.f32 %v2573, %v2580
      %v2599 = vadd.f32 %v2574, %v2580
      %v2600 = vmax.f32 %v2582, 0.0
      %v2601 = vmax.f32 %v2583, 0.0
      %v2602 = vmax.f32 %v2584, 0.0
      %v2603 = vmax.f32 %v2585, 0.0
      %v2604 = vmax.f32 %v2586, 0.0
      %v2605 = vmax.f32 %v2587, 0.0
      %v2606 = vmax.f32 %v2588, 0.0
      %v2607 = vmax.f32 %v2589, 0.0
      %v2608 = vmax.f32 %v2590, 0.0
      %v2609 = vmax.f32 %v2591, 0.0
      %v2610 = vmax.f32 %v2592, 0.0
      %v2611 = vmax.f32 %v2593, 0.0
      %v2612 = vmax.f32 %v2594, 0.0
      %v2613 = vmax.f32 %v2595, 0.0
      %v2614 = vmax.f32 %v2596, 0.0
      %v2615 = vmax.f32 %v2597, 0.0
      %v2616 = vmax.f32 %v2598, 0.0
      %v2617 = vmax.f32 %v2599, 0.0
      %v2618 = vpack.c.bf16 %v2601, %v2600
      %v2619 = vpack.c.bf16 %v2603, %v2602
      %v2620 = vpack.c.bf16 %v2605, %v2604
      %v2621 = vpack.c.bf16 %v2607, %v2606
      %v2622 = vpack.c.bf16 %v2609, %v2608
      %v2623 = vpack.c.bf16 %v2611, %v2610
      %v2624 = vpack.c.bf16 %v2613, %v2612
      %v2625 = vpack.c.bf16 %v2615, %v2614
      %v2626 = vpack.c.bf16 %v2617, %v2616
      %v2636 = vunpack.c.l.b16 %v2618
      %v2637 = vunpack.c.h.b16 %v2618
      %v2638 = vunpack.c.l.b16 %v2619
      %v2639 = vunpack.c.h.b16 %v2619
      %v2640 = vunpack.c.l.b16 %v2620
      %v2641 = vunpack.c.h.b16 %v2620
      %v2642 = vunpack.c.l.b16 %v2621
      %v2643 = vunpack.c.h.b16 %v2621
      %v2644 = vunpack.c.l.b16 %v2622
      %v2645 = vunpack.c.h.b16 %v2622
      %v2646 = vunpack.c.l.b16 %v2623
      %v2647 = vunpack.c.h.b16 %v2623
      %v2648 = vunpack.c.l.b16 %v2624
      %v2649 = vunpack.c.h.b16 %v2624
      %v2650 = vunpack.c.l.b16 %v2625
      %v2651 = vunpack.c.h.b16 %v2625
      %v2652 = vunpack.c.l.b16 %v2626
      %v2653 = vunpack.c.h.b16 %v2626
      %v2654 = vpack.c.b16 %v2636, %v2636
      %v2655 = vpack.c.b16 %v2637, %v2637
      %v2656 = vpack.c.b16 %v2638, %v2638
      %v2657 = vpack.c.b16 %v2639, %v2639
      %v2658 = vpack.c.b16 %v2640, %v2640
      %v2659 = vpack.c.b16 %v2641, %v2641
      %v2660 = vpack.c.b16 %v2642, %v2642
      %v2661 = vpack.c.b16 %v2643, %v2643
      %v2662 = vpack.c.b16 %v2644, %v2644
      %v2663 = vpack.c.b16 %v2645, %v2645
      %v2664 = vpack.c.b16 %v2646, %v2646
      %v2665 = vpack.c.b16 %v2647, %v2647
      %v2666 = vpack.c.b16 %v2648, %v2648
      %v2667 = vpack.c.b16 %v2649, %v2649
      %v2668 = vpack.c.b16 %v2650, %v2650
      %v2669 = vpack.c.b16 %v2651, %v2651
      %v2670 = vpack.c.b16 %v2652, %v2652
      %v2671 = vpack.c.b16 %v2653, %v2653
      %2690 = vst [vmem:[%s233] sm:$0xf] %v2654
      %2691 = vst [vmem:[%s233 + $0x4] sm:$0xf] %v2655
      %2692 = vst [vmem:[%s233 + $0x8] sm:$0xf] %v2656
      %2693 = vst [vmem:[%s233 + $0xc] sm:$0xf] %v2657
      %2694 = vst [vmem:[%s233 + $0x10] sm:$0xf] %v2658
      %2695 = vst [vmem:[%s233 + $0x14] sm:$0xf] %v2659
      %2696 = vst [vmem:[%s233 + $0x18] sm:$0xf] %v2660
      %2697 = vst [vmem:[%s233 + $0x1c] sm:$0xf] %v2661
      %2698 = vst [vmem:[%s233 + $0x20] sm:$0xf] %v2662
      %2699 = vst [vmem:[%s233 + $0x24] sm:$0xf] %v2663
      %2700 = vst [vmem:[%s233 + $0x28] sm:$0xf] %v2664
      %2701 = vst [vmem:[%s233 + $0x2c] sm:$0xf] %v2665
      %2702 = vst [vmem:[%s233 + $0x30] sm:$0xf] %v2666
      %2703 = vst [vmem:[%s233 + $0x34] sm:$0xf] %v2667
      %2704 = vst [vmem:[%s233 + $0x38] sm:$0xf] %v2668
      %2705 = vst [vmem:[%s233 + $0x3c] sm:$0xf] %v2669
      %2706 = vst [vmem:[%s233 + $0x40] sm:$0xf] %v2670
      %2707 = vst [vmem:[%s233 + $0x44] sm:$0xf] %v2671
      %p2708 = scmp.lt.s32.totalorder %s19, 1
      %s2709 = scalar_select %p2708, %s19, 1
      %p2710 = scmp.lt.s32.totalorder %s20, 1
      %s2711 = scalar_select %p2710, %s20, 1
      %s2712 = smul.addr %s2711, 18
      %s2713 = smul.addr %s2709, 36
      %s2714 = sadd.s32 %s2712, %s2713
      %s2715 = smul.addr %s2714, 4
      %s2716 = scalar_lea.vmem %s4, %s2715
      // Predicated region
      $region37: #{inconv_forward.1} parent=35 // pred_check
        %p2717 = pneg %p138
      $region38: #{inconv_forward.1} parent=35 // pred_check_branch
        %2719 = sbr.rel (%p2717) target = $region40
      $region39: #{inconv_forward.1} parent=35 // pred_region
        _
      $region40: #{inconv_forward.1} parent=35 // pred_fallthru
        _
    $region36: #{inconv_forward.1} parent=5 // pred_fallthru
      _
    %p2720 = scmp.le.s32.totalorder 2, %s10
    // Predicated region
    $region41: #{inconv_forward.1} parent=5 // pred_check
      %p2721 = pneg %p2720
    $region42: #{inconv_forward.1} parent=5 // pred_check_branch
      %2723 = sbr.rel (%p2721) target = $region44
    $region43: #{inconv_forward.1} parent=5 // pred_region
      %s2724 = ssub.s32 %s10, 2
      // Predicated region
      $region45: #{inconv_forward.1} parent=43 // pred_check
        %p2725 = pneg %p144
      $region46: #{inconv_forward.1} parent=43 // pred_check_branch
        %2727 = sbr.rel (%p2725) target = $region48
      $region47: #{inconv_forward.1} parent=43 // pred_region
        %p2728 = scmp.lt.s32.totalorder %s21, 1
        %s2729 = scalar_select %p2728, %s21, 1
        %p2730 = scmp.lt.s32.totalorder %s22, 1
        %s2731 = scalar_select %p2730, %s22, 1
        %s2732 = smul.addr %s2731, 18
        %s2733 = smul.addr %s2729, 36
        %s2734 = sadd.s32 %s2732, %s2733
        %s2735 = smul.addr %s2734, 4
        %s2736 = scalar_lea.vmem %s4, %s2735
      $region48: #{inconv_forward.1} parent=43 // pred_fallthru
        _
    $region44: #{inconv_forward.1} parent=5 // pred_fallthru
      _
  $region6: #{inconv_forward.1} parent=0 // loop_footer
    %s14 = sadd.s32 1, %s10
  $region7: #{inconv_forward.1} parent=0 // loop_footer_branch
    %9 = sbr.rel target = $region3
  $region8: #{inconv_forward.1} parent=0 // loop_exit
    _

</llo_original>
